<compile_context>
chip_gen: v5e
topology: v5e:2x2
jax: 0.10.0
libtpu: 0.0.40
codegen_flags: <defaults>
</compile_context>

<pallas_src>
import numpy as np
import jax
import jax.numpy as jnp
from jax.experimental import pallas as pl
from jax.experimental.pallas import tpu as pltpu


def _round_up(x, m):
    return ((x + m - 1) // m) * m


# ----------------------------------------------------------------------------
# Pallas kernel 1: M-tiled GEMM + bias (bf16 MXU inputs, f32 accumulate/out).
# Used for every strided conv (via shifted-slice patches) and 1x1 conv.
# ----------------------------------------------------------------------------
def _matmul_bias_kernel(x_ref, w_ref, b_ref, o_ref):
    o_ref[...] = (jnp.dot(x_ref[...], w_ref[...],
                          preferred_element_type=jnp.float32) + b_ref[...])


def matmul_bias(x, w, b):
    """y = x @ w + b.  x: [M, K], w: [K, N], b: [N]  ->  [M, N] float32.
    Tiled over M so large M pipelines; K/N stay untiled (FVAE weights are
    small), which keeps the weight block resident across grid steps."""
    M, K = x.shape
    K2, N = w.shape
    assert K == K2
    tm = 256 if M >= 256 else _round_up(max(M, 1), 16)
    Mp = _round_up(M, tm)
    xb = x.astype(jnp.bfloat16)
    if Mp != M:
        xb = jnp.pad(xb, ((0, Mp - M), (0, 0)))
    out = pl.pallas_call(
        _matmul_bias_kernel,
        out_shape=jax.ShapeDtypeStruct((Mp, N), jnp.float32),
        grid=(Mp // tm,),
        in_specs=[
            pl.BlockSpec((tm, K), lambda i: (i, 0)),
            pl.BlockSpec((K, N), lambda i: (0, 0)),
            pl.BlockSpec((1, N), lambda i: (0, 0)),
        ],
        out_specs=pl.BlockSpec((tm, N), lambda i: (i, 0)),
        compiler_params=pltpu.CompilerParams(
            dimension_semantics=("parallel",)),
    )(xb, w.astype(jnp.bfloat16), b.reshape(1, N).astype(jnp.float32))
    return out[:M]


# ----------------------------------------------------------------------------
# Pallas kernel 2: fully fused WaveNet (WN) stack, grid over batch.
# Per layer (all inside one kernel invocation, layers unrolled):
#   x_in = Conv1d_k(x)   -- one deep dot on a [T, K*H] slab of shifted slices
#   acts = tanh(x_in[:H] + cond_l[:H]) * sigmoid(x_in[H:] + cond_l[H:])
#   rs   = 1x1 Conv(acts)
#   x    = (x + rs[:, :H]) * nonpadding       (residual, kept in VMEM scratch)
#   skip += rs[:, H:]
# Output: sum(skips) * nonpadding.
# ----------------------------------------------------------------------------
def _wn_stack_kernel(x_ref, np_ref, cond_ref, in_w_ref, in_b_ref,
                     rs_w_ref, rs_b_ref, out_ref, xpad_buf):
    L, KH, H2 = in_w_ref.shape
    H = H2 // 2
    K = KH // H
    T = x_ref.shape[1]
    pad = (K - 1) // 2

    npad = np_ref[0]                                   # [T, 1]
    xpad_buf[...] = jnp.zeros_like(xpad_buf)           # halo rows stay zero
    x = x_ref[0] * npad                                # encoder pre-mask fused
    skip = jnp.zeros((T, H), jnp.float32)

    for l in range(L):                                 # static unroll
        xpad_buf[pad:pad + T, :] = x
        # [T, K*H] slab from K shifted views of the padded residual buffer.
        slab = jnp.concatenate([xpad_buf[k:k + T, :] for k in range(K)],
                               axis=-1)
        z = jnp.dot(slab.astype(jnp.bfloat16), in_w_ref[l],
                    preferred_element_type=jnp.float32)
        cond_l = cond_ref[0, :, l * 2 * H:(l + 1) * 2 * H].astype(jnp.float32)
        z = z + in_b_ref[l] + cond_l                   # dropout p=0 -> identity
        acts = jnp.tanh(z[:, :H]) * jax.nn.sigmoid(z[:, H:])
        rs = jnp.dot(acts.astype(jnp.bfloat16), rs_w_ref[l],
                     preferred_element_type=jnp.float32) + rs_b_ref[l]
        x = (x + rs[:, :H]) * npad                     # residual path
        skip = skip + rs[:, H:]                        # skip accumulation

    out_ref[0] = skip * npad


def wn_stack(x_btc, np_btc, cond_all_bf16, in_w, in_b, rs_w, rs_b):
    B, T, H = x_btc.shape
    L, KH, H2 = in_w.shape
    K = KH // H
    pad = (K - 1) // 2
    return pl.pallas_call(
        _wn_stack_kernel,
        out_shape=jax.ShapeDtypeStruct((B, T, H), jnp.float32),
        grid=(B,),
        in_specs=[
            pl.BlockSpec((1, T, H), lambda b: (b, 0, 0)),
            pl.BlockSpec((1, T, 1), lambda b: (b, 0, 0)),
            pl.BlockSpec((1, T, H2 * L), lambda b: (b, 0, 0)),
            pl.BlockSpec((L, KH, H2), lambda b: (0, 0, 0)),   # resident weights
            pl.BlockSpec((L, 1, H2), lambda b: (0, 0, 0)),
            pl.BlockSpec((L, H, H2), lambda b: (0, 0, 0)),
            pl.BlockSpec((L, 1, H2), lambda b: (0, 0, 0)),
        ],
        out_specs=pl.BlockSpec((1, T, H), lambda b: (b, 0, 0)),
        scratch_shapes=[pltpu.VMEM((T + 2 * pad, H), jnp.float32)],
        compiler_params=pltpu.CompilerParams(
            dimension_semantics=("parallel",),
            vmem_limit_bytes=48 * 1024 * 1024),
    )(x_btc.astype(jnp.float32), np_btc.astype(jnp.float32), cond_all_bf16,
      in_w, in_b, rs_w, rs_b)


# ----------------------------------------------------------------------------
# Pallas kernel 3: fused 1x1 out_proj + reparameterized sample + masked-KL
# reduction.  Grid over batch; kl/np sums accumulate into (1,1) outputs with
# pl.when init on the first grid step (axis marked "arbitrary").
# ----------------------------------------------------------------------------
def _outproj_sample_kl_kernel(h_ref, eps_ref, np_ref, w_ref, b_ref,
                              out_ref, z_ref, klsum_ref, npsum_ref):
    bidx = pl.program_id(0)

    @pl.when(bidx == 0)
    def _():
        klsum_ref[...] = jnp.zeros_like(klsum_ref)
        npsum_ref[...] = jnp.zeros_like(npsum_ref)

    C = z_ref.shape[2]
    h = h_ref[0]                                        # [T, H]
    out = jnp.dot(h.astype(jnp.bfloat16), w_ref[...],
                  preferred_element_type=jnp.float32) + b_ref[...]
    m = out[:, :C]
    logs = out[:, C:]
    sigma = jnp.exp(logs)
    z = m + eps_ref[0] * sigma
    out_ref[0] = out
    z_ref[0] = z
    npad = np_ref[0]                                    # [T, 1]
    # KL( N(m, sigma) || N(0, 1) ) = -logs + (sigma^2 + m^2)/2 - 1/2
    kl = (-logs + 0.5 * (sigma * sigma + m * m) - 0.5) * npad
    klsum_ref[...] = klsum_ref[...] + jnp.sum(kl)
    npsum_ref[...] = npsum_ref[...] + jnp.sum(npad)


def outproj_sample_kl(h, eps, np_btc, w_h2c, bias_2c):
    B, T, H = h.shape
    C2 = w_h2c.shape[1]
    C = C2 // 2
    out, z, klsum, npsum = pl.pallas_call(
        _outproj_sample_kl_kernel,
        out_shape=(jax.ShapeDtypeStruct((B, T, C2), jnp.float32),
                   jax.ShapeDtypeStruct((B, T, C), jnp.float32),
                   jax.ShapeDtypeStruct((1, 1), jnp.float32),
                   jax.ShapeDtypeStruct((1, 1), jnp.float32)),
        grid=(B,),
        in_specs=[
            pl.BlockSpec((1, T, H), lambda b: (b, 0, 0)),
            pl.BlockSpec((1, T, C), lambda b: (b, 0, 0)),
            pl.BlockSpec((1, T, 1), lambda b: (b, 0, 0)),
            pl.BlockSpec((H, C2), lambda b: (0, 0)),
            pl.BlockSpec((1, C2), lambda b: (0, 0)),
        ],
        out_specs=(pl.BlockSpec((1, T, C2), lambda b: (b, 0, 0)),
                   pl.BlockSpec((1, T, C), lambda b: (b, 0, 0)),
                   pl.BlockSpec((1, 1), lambda b: (0, 0)),
                   pl.BlockSpec((1, 1), lambda b: (0, 0))),
        compiler_params=pltpu.CompilerParams(
            dimension_semantics=("arbitrary",)),   # scalar sums accumulate
    )(h, eps, np_btc, w_h2c.astype(jnp.bfloat16),
      bias_2c.reshape(1, C2).astype(jnp.float32))
    return out, z, klsum[0, 0], npsum[0, 0]


# ----------------------------------------------------------------------------
# Conv wrappers: patch building from static *strided slices* (no gather),
# GEMM in the tiled Pallas kernel.
# ----------------------------------------------------------------------------
def conv1d_strided_btc(x_btc, w_oik, b, stride, pad):
    """PyTorch Conv1d semantics, channels-last input.
    x_btc: [B, T, C_in], w_oik: torch weight [C_out, C_in, K]."""
    B, T, Cin = x_btc.shape
    Cout, _, K = w_oik.shape
    xp = jnp.pad(x_btc, ((0, 0), (pad, pad), (0, 0)))
    T_out = (T + 2 * pad - K) // stride + 1
    # K static shifted strided slices (XLA slices, not gathers).
    cols = [xp[:, k: k + (T_out - 1) * stride + 1: stride, :] for k in range(K)]
    patches = jnp.concatenate(cols, axis=-1)              # [B, T_out, K*Cin]
    patches = patches.reshape(B * T_out, K * Cin)
    w2 = jnp.transpose(w_oik, (2, 1, 0)).reshape(K * Cin, Cout)
    y = matmul_bias(patches, w2, b)                       # tiled Pallas GEMM
    return y.reshape(B, T_out, Cout)


def conv1x1_btc(x_btc, w_oi1, b):
    B, T, Cin = x_btc.shape
    Cout = w_oi1.shape[0]
    w2 = jnp.transpose(w_oi1[:, :, 0], (1, 0))
    y = matmul_bias(x_btc.reshape(B * T, Cin), w2, b)
    return y.reshape(B, T, Cout)


# ----------------------------------------------------------------------------
# WN weight stacking (weight-norm already folded into plain weights).
# ----------------------------------------------------------------------------
def prepare_wn_stack(wn):
    L = len(wn['in_w'])
    K, H, H2 = wn['in_w'][0].shape
    in_w = jnp.stack([w.reshape(K * H, H2) for w in wn['in_w']]
                     ).astype(jnp.bfloat16)                 # [L, K*H, 2H]
    in_b = jnp.stack([b.reshape(1, H2) for b in wn['in_b']]
                     ).astype(jnp.float32)                  # [L, 1, 2H]
    rs_w = jnp.stack(wn['rs_w']).astype(jnp.bfloat16)       # [L, H, 2H]
    rs_b = jnp.stack([b.reshape(1, H2) for b in wn['rs_b']]
                     ).astype(jnp.float32)                  # [L, 1, 2H]
    return in_w, in_b, rs_w, rs_b


# ----------------------------------------------------------------------------
# FVAE forward (training path: infer=False, use_prior_flow=False)
# ----------------------------------------------------------------------------
def fvae_forward(params, x_btc, nonpadding_b1t, cond_bct, eps, cfg):
    """x_btc: [B, T, C_in_out] (torch `x`; encoder sees x.transpose(1, 2)),
    nonpadding_b1t: [B, 1, T], cond_bct: [B, C_cond, T].
    Returns (z_q, loss_kl, z_p=None, m_q, logs_q) with z/m/logs as
    [B, c_latent, T']."""
    strides = cfg['strides']
    s = int(np.prod(strides))
    c_latent = cfg['c_latent']
    cond_btc = jnp.transpose(cond_bct, (0, 2, 1))

    # g_pre_net: strided convs on cond
    cond_sqz = cond_btc
    for w, b, st in zip(params['g_pre_w'], params['g_pre_b'], strides):
        cond_sqz = conv1d_strided_btc(cond_sqz, w, b, stride=st, pad=st // 2)

    # encoder pre_net: strided convs on x
    h = x_btc
    for w, b, st in zip(params['enc_pre_w'], params['enc_pre_b'], strides):
        h = conv1d_strided_btc(h, w, b, stride=st, pad=st // 2)
    T_out = h.shape[1]

    # nonpadding[:, :, ::prod(strides)][:, :, :T_out]
    np_btc = nonpadding_b1t[:, 0, ::s][:, :T_out][:, :, None]   # [B, T_out, 1]

    # WN cond layer (1x1 conv over all layers at once), then fused WN stack.
    wn = params['enc_wn']
    cond_all = conv1x1_btc(cond_sqz, wn['cond_w'], wn['cond_b'])
    in_w, in_b, rs_w, rs_b = prepare_wn_stack(wn)
    h_wn = wn_stack(h, np_btc, cond_all.astype(jnp.bfloat16),
                    in_w, in_b, rs_w, rs_b)

    # Fused out_proj + reparameterized sample + masked KL.
    w_out = jnp.transpose(params['enc_out_w'][:, :, 0], (1, 0))   # [H, 2C]
    out, z, kl_sum, np_sum = outproj_sample_kl(h_wn, eps, np_btc, w_out,
                                               params['enc_out_b'])
    m = out[:, :, :c_latent]
    logs = out[:, :, c_latent:]
    loss_kl = kl_sum / np_sum / c_latent

    to_bct = lambda a: jnp.transpose(a, (0, 2, 1))
    return to_bct(z), loss_kl, None, to_bct(m), to_bct(logs)


# ----------------------------------------------------------------------------
# Deterministic synthetic parameter init (shapes follow the torch __init__)
# ----------------------------------------------------------------------------
def init_params(key, cfg):
    c_in, H = cfg['c_in_out'], cfg['hidden_size']
    c_lat, c_cond = cfg['c_latent'], cfg['c_cond']
    K, n_layers = cfg['kernel_size'], cfg['enc_n_layers']
    strides = cfg['strides']
    keys = iter(jax.random.split(key, 64))

    def nrm(shape, scale=0.2):
        return (scale * jax.random.normal(next(keys), shape)).astype(jnp.float32)

    p = {}
    # g_pre_net: Conv1d(c_cond, c_cond, 2s, stride=s, padding=s//2) per stride
    p['g_pre_w'] = [nrm((c_cond, c_cond, 2 * s)) for s in strides]
    p['g_pre_b'] = [nrm((c_cond,)) for _ in strides]
    # encoder pre_net
    enc_pre_w, enc_pre_b, cin = [], [], c_in
    for s in strides:
        enc_pre_w.append(nrm((H, cin, 2 * s)))
        enc_pre_b.append(nrm((H,)))
        cin = H
    p['enc_pre_w'], p['enc_pre_b'] = enc_pre_w, enc_pre_b
    # encoder WN (weight_norm folded into plain weights)
    wn = {'cond_w': nrm((2 * H * n_layers, c_cond, 1)),
          'cond_b': nrm((2 * H * n_layers,)),
          'in_w': [], 'in_b': [], 'rs_w': [], 'rs_b': []}
    for i in range(n_layers):
        w_in = nrm((2 * H, H, K))                          # torch [2H, H, K]
        wn['in_w'].append(jnp.transpose(w_in, (2, 1, 0)))  # -> kernel [K, H, 2H]
        wn['in_b'].append(nrm((2 * H,)))
        if i < n_layers - 1:
            w_rs = nrm((2 * H, H, 1))
            wn['rs_w'].append(jnp.transpose(w_rs[:, :, 0], (1, 0)))  # [H, 2H]
            wn['rs_b'].append(nrm((2 * H,)))
        else:
            # Last layer has H output channels (all go to the skip path).
            # Zero-pad the residual half so one stacked weight shape is reused;
            # the residual update becomes a no-op (matching torch, where x is
            # simply not updated after the last layer).
            w_rs = nrm((H, H, 1))
            wn['rs_w'].append(jnp.concatenate(
                [jnp.zeros((H, H), jnp.float32),
                 jnp.transpose(w_rs[:, :, 0], (1, 0))], axis=1))
            wn['rs_b'].append(jnp.concatenate(
                [jnp.zeros((H,), jnp.float32), nrm((H,))], axis=0))
    p['enc_wn'] = wn
    # out_proj: Conv1d(H, 2*c_latent, 1)
    p['enc_out_w'] = nrm((2 * c_lat, H, 1))
    p['enc_out_b'] = nrm((2 * c_lat,))
    # NOTE: decoder / prior-flow parameters exist in the torch __init__ but are
    # never touched by FVAE.forward, so they are not materialized here.
    return p


if __name__ == "__main__":
    cfg = dict(c_in_out=8, hidden_size=32, c_latent=4, kernel_size=3,
               enc_n_layers=2, c_cond=8, strides=[4])
    B, T = 2, 32
    key = jax.random.PRNGKey(0)
    k_par, k_x, k_cond, k_eps = jax.random.split(key, 4)
    params = init_params(k_par, cfg)

    x = jax.random.normal(k_x, (B, T, cfg['c_in_out']), jnp.float32)      # [B, T, C_in_out]
    cond = jax.random.normal(k_cond, (B, cfg['c_cond'], T), jnp.float32)  # [B, C_cond, T]
    nonpadding = jnp.ones((B, 1, T), jnp.float32).at[1, 0, 24:].set(0.0)  # [B, 1, T]
    s = int(np.prod(cfg['strides']))
    T_out = (T + 2 * (s // 2) - 2 * s) // s + 1
    # torch uses randn_like(m); supply the standard-normal draw explicitly.
    eps = jax.random.normal(k_eps, (B, T_out, cfg['c_latent']), jnp.float32)

    fwd = jax.jit(lambda p, xx, npad, cc, ee: fvae_forward(p, xx, npad, cc, ee, cfg))
    z_q, loss_kl, z_p, m_q, logs_q = fwd(params, x, nonpadding, cond, eps)
    jax.block_until_ready((z_q, loss_kl, m_q, logs_q))

    assert z_q.shape == (B, cfg['c_latent'], T_out)
    assert m_q.shape == (B, cfg['c_latent'], T_out)
    assert logs_q.shape == (B, cfg['c_latent'], T_out)
    assert loss_kl.shape == ()
    assert bool(jnp.isfinite(loss_kl)) and bool(jnp.all(jnp.isfinite(z_q)))
    print("KERNEL_OK")
</pallas_src>

<mosaic_0001>
module attributes {stable_mosaic.version = 11 : i64} {
  func.func @_matmul_bias_kernel(%arg0: i32, %arg1: memref<16x64xbf16, #tpu.memory_space<vmem>>, %arg2: memref<64x8xbf16, #tpu.memory_space<vmem>>, %arg3: memref<1x8xf32, #tpu.memory_space<vmem>>, %arg4: memref<16x8xf32, #tpu.memory_space<vmem>>) attributes {dimension_semantics = [#tpu.dimension_semantics<parallel>], iteration_bounds = array<i64: 1>, scalar_prefetch = 0 : i64, scratch_operands = 0 : i64, tpu.core_type = #tpu.core_type<tc>, window_params = [{transform_indices = @transform_0, window_bounds = array<i64: 16, 64>}, {pipeline_mode = #tpu.pipeline_mode<synchronous>, transform_indices = @transform_1, window_bounds = array<i64: 64, 8>}, {pipeline_mode = #tpu.pipeline_mode<synchronous>, transform_indices = @transform_2, window_bounds = array<i64: 1, 8>}, {transform_indices = @transform_3, window_bounds = array<i64: 16, 8>}]} {
    %c0 = arith.constant 0 : index
    %c0_0 = arith.constant 0 : index
    %0 = vector.load %arg1[%c0, %c0_0] : memref<16x64xbf16, #tpu.memory_space<vmem>>, vector<16x64xbf16>
    %c0_1 = arith.constant 0 : index
    %c0_2 = arith.constant 0 : index
    %1 = vector.load %arg2[%c0_1, %c0_2] : memref<64x8xbf16, #tpu.memory_space<vmem>>, vector<64x8xbf16>
    %cst = arith.constant dense<0.000000e+00> : vector<16x8xf32>
    %2 = tpu.matmul %0, %1, %cst {dimension_numbers = #tpu.dot_dimension_numbers<[1], [0], [0], [1], [0, 0, 1, 1], [], []>} : vector<16x64xbf16>, vector<64x8xbf16>, vector<16x8xf32> -> vector<16x8xf32>
    %c0_3 = arith.constant 0 : index
    %c0_4 = arith.constant 0 : index
    %3 = vector.load %arg3[%c0_3, %c0_4] : memref<1x8xf32, #tpu.memory_space<vmem>>, vector<1x8xf32>
    %4 = vector.broadcast %3 : vector<1x8xf32> to vector<16x8xf32>
    %5 = arith.addf %2, %4 : vector<16x8xf32>
    %c0_5 = arith.constant 0 : index
    %c0_6 = arith.constant 0 : index
    %6 = vector.load %arg4[%c0_5, %c0_6] : memref<16x8xf32, #tpu.memory_space<vmem>>, vector<16x8xf32>
    tpu.vector_store %arg4[%c0_5, %c0_6], %5 {strides = array<i32>} : memref<16x8xf32, #tpu.memory_space<vmem>>, vector<16x8xf32>,
    return
  }
  func.func @transform_0(%arg0: i32) -> (i32, i32) {
    %c0_i32 = arith.constant 0 : i32
    %c0_i32_0 = arith.constant 0 : i32
    return %arg0, %c0_i32 : i32, i32
  }
  func.func @transform_1(%arg0: i32) -> (i32, i32) {
    %c0_i32 = arith.constant 0 : i32
    %c0_i32_0 = arith.constant 0 : i32
    %c0_i32_1 = arith.constant 0 : i32
    return %c0_i32, %c0_i32_0 : i32, i32
  }
  func.func @transform_2(%arg0: i32) -> (i32, i32) {
    %c0_i32 = arith.constant 0 : i32
    %c0_i32_0 = arith.constant 0 : i32
    %c0_i32_1 = arith.constant 0 : i32
    return %c0_i32, %c0_i32_0 : i32, i32
  }
  func.func @transform_3(%arg0: i32) -> (i32, i32) {
    %c0_i32 = arith.constant 0 : i32
    %c0_i32_0 = arith.constant 0 : i32
    return %arg0, %c0_i32 : i32, i32
  }
}

module attributes {stable_mosaic.version = 11 : i64} {
  func.func @_matmul_bias_kernel(%arg0: i32, %arg1: memref<16x8xbf16, #tpu.memory_space<vmem>>, %arg2: memref<8x128xbf16, #tpu.memory_space<vmem>>, %arg3: memref<1x128xf32, #tpu.memory_space<vmem>>, %arg4: memref<16x128xf32, #tpu.memory_space<vmem>>) attributes {dimension_semantics = [#tpu.dimension_semantics<parallel>], iteration_bounds = array<i64: 1>, scalar_prefetch = 0 : i64, scratch_operands = 0 : i64, tpu.core_type = #tpu.core_type<tc>, window_params = [{transform_indices = @transform_0, window_bounds = array<i64: 16, 8>}, {pipeline_mode = #tpu.pipeline_mode<synchronous>, transform_indices = @transform_1, window_bounds = array<i64: 8, 128>}, {pipeline_mode = #tpu.pipeline_mode<synchronous>, transform_indices = @transform_2, window_bounds = array<i64: 1, 128>}, {transform_indices = @transform_3, window_bounds = array<i64: 16, 128>}]} {
    %c0 = arith.constant 0 : index
    %c0_0 = arith.constant 0 : index
    %0 = vector.load %arg1[%c0, %c0_0] : memref<16x8xbf16, #tpu.memory_space<vmem>>, vector<16x8xbf16>
    %c0_1 = arith.constant 0 : index
    %c0_2 = arith.constant 0 : index
    %1 = vector.load %arg2[%c0_1, %c0_2] : memref<8x128xbf16, #tpu.memory_space<vmem>>, vector<8x128xbf16>
    %cst = arith.constant dense<0.000000e+00> : vector<16x128xf32>
    %2 = tpu.matmul %0, %1, %cst {dimension_numbers = #tpu.dot_dimension_numbers<[1], [0], [0], [1], [0, 0, 1, 1], [], []>} : vector<16x8xbf16>, vector<8x128xbf16>, vector<16x128xf32> -> vector<16x128xf32>
    %c0_3 = arith.constant 0 : index
    %c0_4 = arith.constant 0 : index
    %3 = vector.load %arg3[%c0_3, %c0_4] : memref<1x128xf32, #tpu.memory_space<vmem>>, vector<1x128xf32>
    %4 = vector.broadcast %3 : vector<1x128xf32> to vector<16x128xf32>
    %5 = arith.addf %2, %4 : vector<16x128xf32>
    %c0_5 = arith.constant 0 : index
    %c0_6 = arith.constant 0 : index
    %6 = vector.load %arg4[%c0_5, %c0_6] : memref<16x128xf32, #tpu.memory_space<vmem>>, vector<16x128xf32>
    tpu.vector_store %arg4[%c0_5, %c0_6], %5 {strides = array<i32>} : memref<16x128xf32, #tpu.memory_space<vmem>>, vector<16x128xf32>,
    return
  }
  func.func @transform_0(%arg0: i32) -> (i32, i32) {
    %c0_i32 = arith.constant 0 : i32
    %c0_i32_0 = arith.constant 0 : i32
    return %arg0, %c0_i32 : i32, i32
  }
  func.func @transform_1(%arg0: i32) -> (i32, i32) {
    %c0_i32 = arith.constant 0 : i32
    %c0_i32_0 = arith.constant 0 : i32
    %c0_i32_1 = arith.constant 0 : i32
    return %c0_i32, %c0_i32_0 : i32, i32
  }
  func.func @transform_2(%arg0: i32) -> (i32, i32) {
    %c0_i32 = arith.constant 0 : i32
    %c0_i32_0 = arith.constant 0 : i32
    %c0_i32_1 = arith.constant 0 : i32
    return %c0_i32, %c0_i32_0 : i32, i32
  }
  func.func @transform_3(%arg0: i32) -> (i32, i32) {
    %c0_i32 = arith.constant 0 : i32
    %c0_i32_0 = arith.constant 0 : i32
    return %arg0, %c0_i32 : i32, i32
  }
}

module attributes {stable_mosaic.version = 11 : i64} {
  func.func @_matmul_bias_kernel(%arg0: i32, %arg1: memref<16x64xbf16, #tpu.memory_space<vmem>>, %arg2: memref<64x32xbf16, #tpu.memory_space<vmem>>, %arg3: memref<1x32xf32, #tpu.memory_space<vmem>>, %arg4: memref<16x32xf32, #tpu.memory_space<vmem>>) attributes {dimension_semantics = [#tpu.dimension_semantics<parallel>], iteration_bounds = array<i64: 1>, scalar_prefetch = 0 : i64, scratch_operands = 0 : i64, tpu.core_type = #tpu.core_type<tc>, window_params = [{transform_indices = @transform_0, window_bounds = array<i64: 16, 64>}, {pipeline_mode = #tpu.pipeline_mode<synchronous>, transform_indices = @transform_1, window_bounds = array<i64: 64, 32>}, {pipeline_mode = #tpu.pipeline_mode<synchronous>, transform_indices = @transform_2, window_bounds = array<i64: 1, 32>}, {transform_indices = @transform_3, window_bounds = array<i64: 16, 32>}]} {
    %c0 = arith.constant 0 : index
    %c0_0 = arith.constant 0 : index
    %0 = vector.load %arg1[%c0, %c0_0] : memref<16x64xbf16, #tpu.memory_space<vmem>>, vector<16x64xbf16>
    %c0_1 = arith.constant 0 : index
    %c0_2 = arith.constant 0 : index
    %1 = vector.load %arg2[%c0_1, %c0_2] : memref<64x32xbf16, #tpu.memory_space<vmem>>, vector<64x32xbf16>
    %cst = arith.constant dense<0.000000e+00> : vector<16x32xf32>
    %2 = tpu.matmul %0, %1, %cst {dimension_numbers = #tpu.dot_dimension_numbers<[1], [0], [0], [1], [0, 0, 1, 1], [], []>} : vector<16x64xbf16>, vector<64x32xbf16>, vector<16x32xf32> -> vector<16x32xf32>
    %c0_3 = arith.constant 0 : index
    %c0_4 = arith.constant 0 : index
    %3 = vector.load %arg3[%c0_3, %c0_4] : memref<1x32xf32, #tpu.memory_space<vmem>>, vector<1x32xf32>
    %4 = vector.broadcast %3 : vector<1x32xf32> to vector<16x32xf32>
    %5 = arith.addf %2, %4 : vector<16x32xf32>
    %c0_5 = arith.constant 0 : index
    %c0_6 = arith.constant 0 : index
    %6 = vector.load %arg4[%c0_5, %c0_6] : memref<16x32xf32, #tpu.memory_space<vmem>>, vector<16x32xf32>
    tpu.vector_store %arg4[%c0_5, %c0_6], %5 {strides = array<i32>} : memref<16x32xf32, #tpu.memory_space<vmem>>, vector<16x32xf32>,
    return
  }
  func.func @transform_0(%arg0: i32) -> (i32, i32) {
    %c0_i32 = arith.constant 0 : i32
    %c0_i32_0 = arith.constant 0 : i32
    return %arg0, %c0_i32 : i32, i32
  }
  func.func @transform_1(%arg0: i32) -> (i32, i32) {
    %c0_i32 = arith.constant 0 : i32
    %c0_i32_0 = arith.constant 0 : i32
    %c0_i32_1 = arith.constant 0 : i32
    return %c0_i32, %c0_i32_0 : i32, i32
  }
  func.func @transform_2(%arg0: i32) -> (i32, i32) {
    %c0_i32 = arith.constant 0 : i32
    %c0_i32_0 = arith.constant 0 : i32
    %c0_i32_1 = arith.constant 0 : i32
    return %c0_i32, %c0_i32_0 : i32, i32
  }
  func.func @transform_3(%arg0: i32) -> (i32, i32) {
    %c0_i32 = arith.constant 0 : i32
    %c0_i32_0 = arith.constant 0 : i32
    return %arg0, %c0_i32 : i32, i32
  }
}

module attributes {stable_mosaic.version = 11 : i64} {
  func.func @_wn_stack_kernel(%arg0: i32, %arg1: memref<1x8x32xf32, #tpu.memory_space<vmem>>, %arg2: memref<1x8x1xf32, #tpu.memory_space<vmem>>, %arg3: memref<1x8x128xbf16, #tpu.memory_space<vmem>>, %arg4: memref<2x96x64xbf16, #tpu.memory_space<vmem>>, %arg5: memref<2x1x64xf32, #tpu.memory_space<vmem>>, %arg6: memref<2x32x64xbf16, #tpu.memory_space<vmem>>, %arg7: memref<2x1x64xf32, #tpu.memory_space<vmem>>, %arg8: memref<1x8x32xf32, #tpu.memory_space<vmem>>, %arg9: memref<10x32xf32, #tpu.memory_space<vmem>>) attributes {dimension_semantics = [#tpu.dimension_semantics<parallel>], iteration_bounds = array<i64: 2>, scalar_prefetch = 0 : i64, scratch_operands = 1 : i64, tpu.core_type = #tpu.core_type<tc>, window_params = [{transform_indices = @transform_0, window_bounds = array<i64: 1, 8, 32>}, {transform_indices = @transform_1, window_bounds = array<i64: 1, 8, 1>}, {transform_indices = @transform_2, window_bounds = array<i64: 1, 8, 128>}, {pipeline_mode = #tpu.pipeline_mode<synchronous>, transform_indices = @transform_3, window_bounds = array<i64: 2, 96, 64>}, {pipeline_mode = #tpu.pipeline_mode<synchronous>, transform_indices = @transform_4, window_bounds = array<i64: 2, 1, 64>}, {pipeline_mode = #tpu.pipeline_mode<synchronous>, transform_indices = @transform_5, window_bounds = array<i64: 2, 32, 64>}, {pipeline_mode = #tpu.pipeline_mode<synchronous>, transform_indices = @transform_6, window_bounds = array<i64: 2, 1, 64>}, {transform_indices = @transform_7, window_bounds = array<i64: 1, 8, 32>}]} {
    %c0 = arith.constant 0 : index
    %c0_0 = arith.constant 0 : index
    %c0_1 = arith.constant 0 : index
    %0 = vector.load %arg2[%c0, %c0_0, %c0_1] : memref<1x8x1xf32, #tpu.memory_space<vmem>>, vector<1x8x1xf32>
    %1 = vector.shape_cast %0 : vector<1x8x1xf32> to vector<8x1xf32>
    %cst = arith.constant 0.000000e+00 : f32
    %2 = vector.broadcast %cst : f32 to vector<10x32xf32>
    %c0_2 = arith.constant 0 : index
    %c0_3 = arith.constant 0 : index
    %3 = vector.load %arg9[%c0_2, %c0_3] : memref<10x32xf32, #tpu.memory_space<vmem>>, vector<10x32xf32>
    tpu.vector_store %arg9[%c0_2, %c0_3], %2 {strides = array<i32>} : memref<10x32xf32, #tpu.memory_space<vmem>>, vector<10x32xf32>,
    %c0_4 = arith.constant 0 : index
    %c0_5 = arith.constant 0 : index
    %c0_6 = arith.constant 0 : index
    %4 = vector.load %arg1[%c0_4, %c0_5, %c0_6] : memref<1x8x32xf32, #tpu.memory_space<vmem>>, vector<1x8x32xf32>
    %5 = vector.shape_cast %4 : vector<1x8x32xf32> to vector<8x32xf32>
    %6 = vector.broadcast %1 : vector<8x1xf32> to vector<8x32xf32>
    %7 = arith.mulf %5, %6 : vector<8x32xf32>
    %cst_7 = arith.constant 0.000000e+00 : f32
    %8 = vector.broadcast %cst_7 : f32 to vector<8x32xf32>
    %c1 = arith.constant 1 : index
    %c0_8 = arith.constant 0 : index
    %9 = vector.load %arg9[%c1, %c0_8] : memref<10x32xf32, #tpu.memory_space<vmem>>, vector<8x32xf32>
    tpu.vector_store %arg9[%c1, %c0_8], %7 {strides = array<i32>} : memref<10x32xf32, #tpu.memory_space<vmem>>, vector<8x32xf32>,
    %c0_9 = arith.constant 0 : index
    %c0_10 = arith.constant 0 : index
    %10 = vector.load %arg9[%c0_9, %c0_10] : memref<10x32xf32, #tpu.memory_space<vmem>>, vector<8x32xf32>
    %c1_11 = arith.constant 1 : index
    %c0_12 = arith.constant 0 : index
    %11 = vector.load %arg9[%c1_11, %c0_12] : memref<10x32xf32, #tpu.memory_space<vmem>>, vector<8x32xf32>
    %c2 = arith.constant 2 : index
    %c0_13 = arith.constant 0 : index
    %12 = vector.load %arg9[%c2, %c0_13] : memref<10x32xf32, #tpu.memory_space<vmem>>, vector<8x32xf32>
    %13 = tpu.concatenate %10, %11, %12 in 1 : vector<8x32xf32>, vector<8x32xf32>, vector<8x32xf32> -> vector<8x96xf32>
    %14 = arith.truncf %13 : vector<8x96xf32> to vector<8x96xbf16>
    %c0_14 = arith.constant 0 : index
    %c0_15 = arith.constant 0 : index
    %c0_16 = arith.constant 0 : index
    %15 = vector.load %arg4[%c0_14, %c0_15, %c0_16] : memref<2x96x64xbf16, #tpu.memory_space<vmem>>, vector<1x96x64xbf16>
    %16 = vector.shape_cast %15 : vector<1x96x64xbf16> to vector<96x64xbf16>
    %cst_17 = arith.constant dense<0.000000e+00> : vector<8x64xf32>
    %17 = tpu.matmul %14, %16, %cst_17 {dimension_numbers = #tpu.dot_dimension_numbers<[1], [0], [0], [1], [0, 0, 1, 1], [], []>} : vector<8x96xbf16>, vector<96x64xbf16>, vector<8x64xf32> -> vector<8x64xf32>
    %c0_18 = arith.constant 0 : index
    %c0_19 = arith.constant 0 : index
    %c0_20 = arith.constant 0 : index
    %18 = vector.load %arg3[%c0_18, %c0_19, %c0_20] : memref<1x8x128xbf16, #tpu.memory_space<vmem>>, vector<1x8x64xbf16>
    %19 = vector.shape_cast %18 : vector<1x8x64xbf16> to vector<8x64xbf16>
    %20 = arith.extf %19 : vector<8x64xbf16> to vector<8x64xf32>
    %c0_21 = arith.constant 0 : index
    %c0_22 = arith.constant 0 : index
    %c0_23 = arith.constant 0 : index
    %21 = vector.load %arg5[%c0_21, %c0_22, %c0_23] : memref<2x1x64xf32, #tpu.memory_space<vmem>>, vector<1x1x64xf32>
    %22 = vector.shape_cast %21 : vector<1x1x64xf32> to vector<1x64xf32>
    %23 = vector.broadcast %22 : vector<1x64xf32> to vector<8x64xf32>
    %24 = arith.addf %17, %23 : vector<8x64xf32>
    %25 = arith.addf %24, %20 : vector<8x64xf32>
    %26 = vector.extract_strided_slice %25 {offsets = [0, 0], sizes = [8, 32], strides = [1, 1]} : vector<8x64xf32> to vector<8x32xf32>
    %27 = math.tanh %26 : vector<8x32xf32>
    %28 = vector.extract_strided_slice %25 {offsets = [0, 32], sizes = [8, 32], strides = [1, 1]} : vector<8x64xf32> to vector<8x32xf32>
    %29 = arith.negf %28 : vector<8x32xf32>
    %30 = math.exp %29 : vector<8x32xf32>
    %cst_24 = arith.constant 1.000000e+00 : f32
    %31 = vector.broadcast %cst_24 : f32 to vector<8x32xf32>
    %32 = arith.addf %31, %30 : vector<8x32xf32>
    %33 = arith.divf %31, %32 : vector<8x32xf32>
    %34 = arith.mulf %27, %33 : vector<8x32xf32>
    %35 = arith.truncf %34 : vector<8x32xf32> to vector<8x32xbf16>
    %c0_25 = arith.constant 0 : index
    %c0_26 = arith.constant 0 : index
    %c0_27 = arith.constant 0 : index
    %36 = vector.load %arg6[%c0_25, %c0_26, %c0_27] : memref<2x32x64xbf16, #tpu.memory_space<vmem>>, vector<1x32x64xbf16>
    %37 = vector.shape_cast %36 : vector<1x32x64xbf16> to vector<32x64xbf16>
    %cst_28 = arith.constant dense<0.000000e+00> : vector<8x64xf32>
    %38 = tpu.matmul %35, %37, %cst_28 {dimension_numbers = #tpu.dot_dimension_numbers<[1], [0], [0], [1], [0, 0, 1, 1], [], []>} : vector<8x32xbf16>, vector<32x64xbf16>, vector<8x64xf32> -> vector<8x64xf32>
    %c0_29 = arith.constant 0 : index
    %c0_30 = arith.constant 0 : index
    %c0_31 = arith.constant 0 : index
    %39 = vector.load %arg7[%c0_29, %c0_30, %c0_31] : memref<2x1x64xf32, #tpu.memory_space<vmem>>, vector<1x1x64xf32>
    %40 = vector.shape_cast %39 : vector<1x1x64xf32> to vector<1x64xf32>
    %41 = vector.broadcast %40 : vector<1x64xf32> to vector<8x64xf32>
    %42 = arith.addf %38, %41 : vector<8x64xf32>
    %43 = vector.extract_strided_slice %42 {offsets = [0, 0], sizes = [8, 32], strides = [1, 1]} : vector<8x64xf32> to vector<8x32xf32>
    %44 = arith.addf %7, %43 : vector<8x32xf32>
    %45 = vector.broadcast %1 : vector<8x1xf32> to vector<8x32xf32>
    %46 = arith.mulf %44, %45 : vector<8x32xf32>
    %47 = vector.extract_strided_slice %42 {offsets = [0, 32], sizes = [8, 32], strides = [1, 1]} : vector<8x64xf32> to vector<8x32xf32>
    %48 = arith.addf %8, %47 : vector<8x32xf32>
    %c1_32 = arith.constant 1 : index
    %c0_33 = arith.constant 0 : index
    %49 = vector.load %arg9[%c1_32, %c0_33] : memref<10x32xf32, #tpu.memory_space<vmem>>, vector<8x32xf32>
    tpu.vector_store %arg9[%c1_32, %c0_33], %46 {strides = array<i32>} : memref<10x32xf32, #tpu.memory_space<vmem>>, vector<8x32xf32>,
    %c0_34 = arith.constant 0 : index
    %c0_35 = arith.constant 0 : index
    %50 = vector.load %arg9[%c0_34, %c0_35] : memref<10x32xf32, #tpu.memory_space<vmem>>, vector<8x32xf32>
    %c1_36 = arith.constant 1 : index
    %c0_37 = arith.constant 0 : index
    %51 = vector.load %arg9[%c1_36, %c0_37] : memref<10x32xf32, #tpu.memory_space<vmem>>, vector<8x32xf32>
    %c2_38 = arith.constant 2 : index
    %c0_39 = arith.constant 0 : index
    %52 = vector.load %arg9[%c2_38, %c0_39] : memref<10x32xf32, #tpu.memory_space<vmem>>, vector<8x32xf32>
    %53 = tpu.concatenate %50, %51, %52 in 1 : vector<8x32xf32>, vector<8x32xf32>, vector<8x32xf32> -> vector<8x96xf32>
    %54 = arith.truncf %53 : vector<8x96xf32> to vector<8x96xbf16>
    %c1_40 = arith.constant 1 : index
    %c0_41 = arith.constant 0 : index
    %c0_42 = arith.constant 0 : index
    %55 = vector.load %arg4[%c1_40, %c0_41, %c0_42] : memref<2x96x64xbf16, #tpu.memory_space<vmem>>, vector<1x96x64xbf16>
    %56 = vector.shape_cast %55 : vector<1x96x64xbf16> to vector<96x64xbf16>
    %cst_43 = arith.constant dense<0.000000e+00> : vector<8x64xf32>
    %57 = tpu.matmul %54, %56, %cst_43 {dimension_numbers = #tpu.dot_dimension_numbers<[1], [0], [0], [1], [0, 0, 1, 1], [], []>} : vector<8x96xbf16>, vector<96x64xbf16>, vector<8x64xf32> -> vector<8x64xf32>
    %c0_44 = arith.constant 0 : index
    %c0_45 = arith.constant 0 : index
    %c64 = arith.constant 64 : index
    %58 = vector.load %arg3[%c0_44, %c0_45, %c64] : memref<1x8x128xbf16, #tpu.memory_space<vmem>>, vector<1x8x64xbf16>
    %59 = vector.shape_cast %58 : vector<1x8x64xbf16> to vector<8x64xbf16>
    %60 = arith.extf %59 : vector<8x64xbf16> to vector<8x64xf32>
    %c1_46 = arith.constant 1 : index
    %c0_47 = arith.constant 0 : index
    %c0_48 = arith.constant 0 : index
    %61 = vector.load %arg5[%c1_46, %c0_47, %c0_48] : memref<2x1x64xf32, #tpu.memory_space<vmem>>, vector<1x1x64xf32>
    %62 = vector.shape_cast %61 : vector<1x1x64xf32> to vector<1x64xf32>
    %63 = vector.broadcast %62 : vector<1x64xf32> to vector<8x64xf32>
    %64 = arith.addf %57, %63 : vector<8x64xf32>
    %65 = arith.addf %64, %60 : vector<8x64xf32>
    %66 = vector.extract_strided_slice %65 {offsets = [0, 0], sizes = [8, 32], strides = [1, 1]} : vector<8x64xf32> to vector<8x32xf32>
    %67 = math.tanh %66 : vector<8x32xf32>
    %68 = vector.extract_strided_slice %65 {offsets = [0, 32], sizes = [8, 32], strides = [1, 1]} : vector<8x64xf32> to vector<8x32xf32>
    %69 = arith.negf %68 : vector<8x32xf32>
    %70 = math.exp %69 : vector<8x32xf32>
    %cst_49 = arith.constant 1.000000e+00 : f32
    %71 = vector.broadcast %cst_49 : f32 to vector<8x32xf32>
    %72 = arith.addf %71, %70 : vector<8x32xf32>
    %73 = arith.divf %71, %72 : vector<8x32xf32>
    %74 = arith.mulf %67, %73 : vector<8x32xf32>
    %75 = arith.truncf %74 : vector<8x32xf32> to vector<8x32xbf16>
    %c1_50 = arith.constant 1 : index
    %c0_51 = arith.constant 0 : index
    %c0_52 = arith.constant 0 : index
    %76 = vector.load %arg6[%c1_50, %c0_51, %c0_52] : memref<2x32x64xbf16, #tpu.memory_space<vmem>>, vector<1x32x64xbf16>
    %77 = vector.shape_cast %76 : vector<1x32x64xbf16> to vector<32x64xbf16>
    %cst_53 = arith.constant dense<0.000000e+00> : vector<8x64xf32>
    %78 = tpu.matmul %75, %77, %cst_53 {dimension_numbers = #tpu.dot_dimension_numbers<[1], [0], [0], [1], [0, 0, 1, 1], [], []>} : vector<8x32xbf16>, vector<32x64xbf16>, vector<8x64xf32> -> vector<8x64xf32>
    %c1_54 = arith.constant 1 : index
    %c0_55 = arith.constant 0 : index
    %c0_56 = arith.constant 0 : index
    %79 = vector.load %arg7[%c1_54, %c0_55, %c0_56] : memref<2x1x64xf32, #tpu.memory_space<vmem>>, vector<1x1x64xf32>
    %80 = vector.shape_cast %79 : vector<1x1x64xf32> to vector<1x64xf32>
    %81 = vector.broadcast %80 : vector<1x64xf32> to vector<8x64xf32>
    %82 = arith.addf %78, %81 : vector<8x64xf32>
    %83 = vector.extract_strided_slice %82 {offsets = [0, 32], sizes = [8, 32], strides = [1, 1]} : vector<8x64xf32> to vector<8x32xf32>
    %84 = arith.addf %48, %83 : vector<8x32xf32>
    %85 = vector.broadcast %1 : vector<8x1xf32> to vector<8x32xf32>
    %86 = arith.mulf %84, %85 : vector<8x32xf32>
    %c0_57 = arith.constant 0 : index
    %c0_58 = arith.constant 0 : index
    %c0_59 = arith.constant 0 : index
    %87 = vector.load %arg8[%c0_57, %c0_58, %c0_59] : memref<1x8x32xf32, #tpu.memory_space<vmem>>, vector<1x8x32xf32>
    %88 = vector.shape_cast %87 : vector<1x8x32xf32> to vector<8x32xf32>
    %89 = vector.shape_cast %86 : vector<8x32xf32> to vector<1x8x32xf32>
    tpu.vector_store %arg8[%c0_57, %c0_58, %c0_59], %89 {strides = array<i32>} : memref<1x8x32xf32, #tpu.memory_space<vmem>>, vector<1x8x32xf32>,
    return
  }
  func.func @transform_0(%arg0: i32) -> (i32, i32, i32) {
    %c0_i32 = arith.constant 0 : i32
    %c0_i32_0 = arith.constant 0 : i32
    %c0_i32_1 = arith.constant 0 : i32
    return %arg0, %c0_i32, %c0_i32_0 : i32, i32, i32
  }
  func.func @transform_1(%arg0: i32) -> (i32, i32, i32) {
    %c0_i32 = arith.constant 0 : i32
    %c0_i32_0 = arith.constant 0 : i32
    %c0_i32_1 = arith.constant 0 : i32
    return %arg0, %c0_i32, %c0_i32_0 : i32, i32, i32
  }
  func.func @transform_2(%arg0: i32) -> (i32, i32, i32) {
    %c0_i32 = arith.constant 0 : i32
    %c0_i32_0 = arith.constant 0 : i32
    %c0_i32_1 = arith.constant 0 : i32
    return %arg0, %c0_i32, %c0_i32_0 : i32, i32, i32
  }
  func.func @transform_3(%arg0: i32) -> (i32, i32, i32) {
    %c0_i32 = arith.constant 0 : i32
    %c0_i32_0 = arith.constant 0 : i32
    %c0_i32_1 = arith.constant 0 : i32
    %c0_i32_2 = arith.constant 0 : i32
    return %c0_i32, %c0_i32_0, %c0_i32_1 : i32, i32, i32
  }
  func.func @transform_4(%arg0: i32) -> (i32, i32, i32) {
    %c0_i32 = arith.constant 0 : i32
    %c0_i32_0 = arith.constant 0 : i32
    %c0_i32_1 = arith.constant 0 : i32
    %c0_i32_2 = arith.constant 0 : i32
    return %c0_i32, %c0_i32_0, %c0_i32_1 : i32, i32, i32
  }
  func.func @transform_5(%arg0: i32) -> (i32, i32, i32) {
    %c0_i32 = arith.constant 0 : i32
    %c0_i32_0 = arith.constant 0 : i32
    %c0_i32_1 = arith.constant 0 : i32
    %c0_i32_2 = arith.constant 0 : i32
    return %c0_i32, %c0_i32_0, %c0_i32_1 : i32, i32, i32
  }
  func.func @transform_6(%arg0: i32) -> (i32, i32, i32) {
    %c0_i32 = arith.constant 0 : i32
    %c0_i32_0 = arith.constant 0 : i32
    %c0_i32_1 = arith.constant 0 : i32
    %c0_i32_2 = arith.constant 0 : i32
    return %c0_i32, %c0_i32_0, %c0_i32_1 : i32, i32, i32
  }
  func.func @transform_7(%arg0: i32) -> (i32, i32, i32) {
    %c0_i32 = arith.constant 0 : i32
    %c0_i32_0 = arith.constant 0 : i32
    %c0_i32_1 = arith.constant 0 : i32
    return %arg0, %c0_i32, %c0_i32_0 : i32, i32, i32
  }
}

module attributes {stable_mosaic.version = 11 : i64} {
  func.func @_outproj_sample_kl_kernel(%arg0: i32, %arg1: memref<1x8x32xf32, #tpu.memory_space<vmem>>, %arg2: memref<1x8x4xf32, #tpu.memory_space<vmem>>, %arg3: memref<1x8x1xf32, #tpu.memory_space<vmem>>, %arg4: memref<32x8xbf16, #tpu.memory_space<vmem>>, %arg5: memref<1x8xf32, #tpu.memory_space<vmem>>, %arg6: memref<1x8x8xf32, #tpu.memory_space<vmem>>, %arg7: memref<1x8x4xf32, #tpu.memory_space<vmem>>, %arg8: memref<1x1xf32, #tpu.memory_space<vmem>>, %arg9: memref<1x1xf32, #tpu.memory_space<vmem>>) attributes {dimension_semantics = [#tpu.dimension_semantics<arbitrary>], iteration_bounds = array<i64: 2>, scalar_prefetch = 0 : i64, scratch_operands = 0 : i64, tpu.core_type = #tpu.core_type<tc>, window_params = [{transform_indices = @transform_0, window_bounds = array<i64: 1, 8, 32>}, {transform_indices = @transform_1, window_bounds = array<i64: 1, 8, 4>}, {transform_indices = @transform_2, window_bounds = array<i64: 1, 8, 1>}, {pipeline_mode = #tpu.pipeline_mode<synchronous>, transform_indices = @transform_3, window_bounds = array<i64: 32, 8>}, {pipeline_mode = #tpu.pipeline_mode<synchronous>, transform_indices = @transform_4, window_bounds = array<i64: 1, 8>}, {transform_indices = @transform_5, window_bounds = array<i64: 1, 8, 8>}, {transform_indices = @transform_6, window_bounds = array<i64: 1, 8, 4>}, {pipeline_mode = #tpu.pipeline_mode<synchronous>, transform_indices = @transform_7, window_bounds = array<i64: 1, 1>}, {pipeline_mode = #tpu.pipeline_mode<synchronous>, transform_indices = @transform_8, window_bounds = array<i64: 1, 1>}]} {
    %c0_i32 = arith.constant 0 : i32
    %0 = arith.cmpi eq, %arg0, %c0_i32 : i32
    %1 = arith.extui %0 : i1 to i32
    %c0_i32_0 = arith.constant 0 : i32
    %2 = arith.cmpi ne, %1, %c0_i32_0 : i32
    scf.if %2 {
      %cst_32 = arith.constant 0.000000e+00 : f32
      %54 = vector.broadcast %cst_32 : f32 to vector<1x1xf32>
      %c0_33 = arith.constant 0 : index
      %c0_34 = arith.constant 0 : index
      %55 = vector.load %arg8[%c0_33, %c0_34] : memref<1x1xf32, #tpu.memory_space<vmem>>, vector<1x1xf32>
      tpu.vector_store %arg8[%c0_33, %c0_34], %54 {strides = array<i32>} : memref<1x1xf32, #tpu.memory_space<vmem>>, vector<1x1xf32>,
      %cst_35 = arith.constant 0.000000e+00 : f32
      %56 = vector.broadcast %cst_35 : f32 to vector<1x1xf32>
      %c0_36 = arith.constant 0 : index
      %c0_37 = arith.constant 0 : index
      %57 = vector.load %arg9[%c0_36, %c0_37] : memref<1x1xf32, #tpu.memory_space<vmem>>, vector<1x1xf32>
      tpu.vector_store %arg9[%c0_36, %c0_37], %56 {strides = array<i32>} : memref<1x1xf32, #tpu.memory_space<vmem>>, vector<1x1xf32>,
    } else {
    }
    %c0 = arith.constant 0 : index
    %c0_1 = arith.constant 0 : index
    %c0_2 = arith.constant 0 : index
    %3 = vector.load %arg1[%c0, %c0_1, %c0_2] : memref<1x8x32xf32, #tpu.memory_space<vmem>>, vector<1x8x32xf32>
    %4 = vector.shape_cast %3 : vector<1x8x32xf32> to vector<8x32xf32>
    %5 = arith.truncf %4 : vector<8x32xf32> to vector<8x32xbf16>
    %c0_3 = arith.constant 0 : index
    %c0_4 = arith.constant 0 : index
    %6 = vector.load %arg4[%c0_3, %c0_4] : memref<32x8xbf16, #tpu.memory_space<vmem>>, vector<32x8xbf16>
    %cst = arith.constant dense<0.000000e+00> : vector<8x8xf32>
    %7 = tpu.matmul %5, %6, %cst {dimension_numbers = #tpu.dot_dimension_numbers<[1], [0], [0], [1], [0, 0, 1, 1], [], []>} : vector<8x32xbf16>, vector<32x8xbf16>, vector<8x8xf32> -> vector<8x8xf32>
    %c0_5 = arith.constant 0 : index
    %c0_6 = arith.constant 0 : index
    %8 = vector.load %arg5[%c0_5, %c0_6] : memref<1x8xf32, #tpu.memory_space<vmem>>, vector<1x8xf32>
    %9 = vector.broadcast %8 : vector<1x8xf32> to vector<8x8xf32>
    %10 = arith.addf %7, %9 : vector<8x8xf32>
    %11 = vector.extract_strided_slice %10 {offsets = [0, 0], sizes = [8, 4], strides = [1, 1]} : vector<8x8xf32> to vector<8x4xf32>
    %12 = vector.extract_strided_slice %10 {offsets = [0, 4], sizes = [8, 4], strides = [1, 1]} : vector<8x8xf32> to vector<8x4xf32>
    %13 = math.exp %12 : vector<8x4xf32>
    %c0_7 = arith.constant 0 : index
    %c0_8 = arith.constant 0 : index
    %c0_9 = arith.constant 0 : index
    %14 = vector.load %arg2[%c0_7, %c0_8, %c0_9] : memref<1x8x4xf32, #tpu.memory_space<vmem>>, vector<1x8x4xf32>
    %15 = vector.shape_cast %14 : vector<1x8x4xf32> to vector<8x4xf32>
    %16 = arith.mulf %15, %13 : vector<8x4xf32>
    %17 = arith.addf %11, %16 : vector<8x4xf32>
    %c0_10 = arith.constant 0 : index
    %c0_11 = arith.constant 0 : index
    %c0_12 = arith.constant 0 : index
    %18 = vector.load %arg6[%c0_10, %c0_11, %c0_12] : memref<1x8x8xf32, #tpu.memory_space<vmem>>, vector<1x8x8xf32>
    %19 = vector.shape_cast %18 : vector<1x8x8xf32> to vector<8x8xf32>
    %20 = vector.shape_cast %10 : vector<8x8xf32> to vector<1x8x8xf32>
    tpu.vector_store %arg6[%c0_10, %c0_11, %c0_12], %20 {strides = array<i32>} : memref<1x8x8xf32, #tpu.memory_space<vmem>>, vector<1x8x8xf32>,
    %c0_13 = arith.constant 0 : index
    %c0_14 = arith.constant 0 : index
    %c0_15 = arith.constant 0 : index
    %21 = vector.load %arg7[%c0_13, %c0_14, %c0_15] : memref<1x8x4xf32, #tpu.memory_space<vmem>>, vector<1x8x4xf32>
    %22 = vector.shape_cast %21 : vector<1x8x4xf32> to vector<8x4xf32>
    %23 = vector.shape_cast %17 : vector<8x4xf32> to vector<1x8x4xf32>
    tpu.vector_store %arg7[%c0_13, %c0_14, %c0_15], %23 {strides = array<i32>} : memref<1x8x4xf32, #tpu.memory_space<vmem>>, vector<1x8x4xf32>,
    %c0_16 = arith.constant 0 : index
    %c0_17 = arith.constant 0 : index
    %c0_18 = arith.constant 0 : index
    %24 = vector.load %arg3[%c0_16, %c0_17, %c0_18] : memref<1x8x1xf32, #tpu.memory_space<vmem>>, vector<1x8x1xf32>
    %25 = vector.shape_cast %24 : vector<1x8x1xf32> to vector<8x1xf32>
    %cst_19 = arith.constant 0.000000e+00 : f32
    %26 = vector.broadcast %cst_19 : f32 to vector<8x4xf32>
    %27 = arith.subf %26, %12 : vector<8x4xf32>
    %28 = arith.mulf %13, %13 : vector<8x4xf32>
    %29 = arith.mulf %11, %11 : vector<8x4xf32>
    %30 = arith.addf %28, %29 : vector<8x4xf32>
    %cst_20 = arith.constant 5.000000e-01 : f32
    %31 = vector.broadcast %cst_20 : f32 to vector<8x4xf32>
    %32 = arith.mulf %31, %30 : vector<8x4xf32>
    %33 = arith.addf %27, %32 : vector<8x4xf32>
    %cst_21 = arith.constant 5.000000e-01 : f32
    %34 = vector.broadcast %cst_21 : f32 to vector<8x4xf32>
    %35 = arith.subf %33, %34 : vector<8x4xf32>
    %36 = vector.broadcast %25 : vector<8x1xf32> to vector<8x4xf32>
    %37 = arith.mulf %35, %36 : vector<8x4xf32>
    %c0_22 = arith.constant 0 : index
    %c0_23 = arith.constant 0 : index
    %38 = vector.load %arg8[%c0_22, %c0_23] : memref<1x1xf32, #tpu.memory_space<vmem>>, vector<1x1xf32>
    %39 = vector.shape_cast %37 : vector<8x4xf32> to vector<1x8x4xf32>
    %cst_24 = arith.constant dense<0.000000e+00> : vector<1xf32>
    %40 = vector.multi_reduction <add>, %39, %cst_24 [1, 2] : vector<1x8x4xf32> to vector<1xf32>
    %41 = vector.shape_cast %40 : vector<1xf32> to vector<1x1x1xf32>
    %42 = vector.extract %41[0, 0, 0] : f32 from vector<1x1x1xf32>
    %43 = vector.broadcast %42 : f32 to vector<1x1xf32>
    %44 = arith.addf %38, %43 : vector<1x1xf32>
    %c0_25 = arith.constant 0 : index
    %c0_26 = arith.constant 0 : index
    %45 = vector.load %arg8[%c0_25, %c0_26] : memref<1x1xf32, #tpu.memory_space<vmem>>, vector<1x1xf32>
    tpu.vector_store %arg8[%c0_25, %c0_26], %44 {strides = array<i32>} : memref<1x1xf32, #tpu.memory_space<vmem>>, vector<1x1xf32>,
    %c0_27 = arith.constant 0 : index
    %c0_28 = arith.constant 0 : index
    %46 = vector.load %arg9[%c0_27, %c0_28] : memref<1x1xf32, #tpu.memory_space<vmem>>, vector<1x1xf32>
    %47 = vector.shape_cast %25 : vector<8x1xf32> to vector<1x8x1xf32>
    %cst_29 = arith.constant dense<0.000000e+00> : vector<1xf32>
    %48 = vector.multi_reduction <add>, %47, %cst_29 [1, 2] : vector<1x8x1xf32> to vector<1xf32>
    %49 = vector.shape_cast %48 : vector<1xf32> to vector<1x1x1xf32>
    %50 = vector.extract %49[0, 0, 0] : f32 from vector<1x1x1xf32>
    %51 = vector.broadcast %50 : f32 to vector<1x1xf32>
    %52 = arith.addf %46, %51 : vector<1x1xf32>
    %c0_30 = arith.constant 0 : index
    %c0_31 = arith.constant 0 : index
    %53 = vector.load %arg9[%c0_30, %c0_31] : memref<1x1xf32, #tpu.memory_space<vmem>>, vector<1x1xf32>
    tpu.vector_store %arg9[%c0_30, %c0_31], %52 {strides = array<i32>} : memref<1x1xf32, #tpu.memory_space<vmem>>, vector<1x1xf32>,
    return
  }
  func.func @transform_0(%arg0: i32) -> (i32, i32, i32) {
    %c0_i32 = arith.constant 0 : i32
    %c0_i32_0 = arith.constant 0 : i32
    %c0_i32_1 = arith.constant 0 : i32
    return %arg0, %c0_i32, %c0_i32_0 : i32, i32, i32
  }
  func.func @transform_1(%arg0: i32) -> (i32, i32, i32) {
    %c0_i32 = arith.constant 0 : i32
    %c0_i32_0 = arith.constant 0 : i32
    %c0_i32_1 = arith.constant 0 : i32
    return %arg0, %c0_i32, %c0_i32_0 : i32, i32, i32
  }
  func.func @transform_2(%arg0: i32) -> (i32, i32, i32) {
    %c0_i32 = arith.constant 0 : i32
    %c0_i32_0 = arith.constant 0 : i32
    %c0_i32_1 = arith.constant 0 : i32
    return %arg0, %c0_i32, %c0_i32_0 : i32, i32, i32
  }
  func.func @transform_3(%arg0: i32) -> (i32, i32) {
    %c0_i32 = arith.constant 0 : i32
    %c0_i32_0 = arith.constant 0 : i32
    %c0_i32_1 = arith.constant 0 : i32
    return %c0_i32, %c0_i32_0 : i32, i32
  }
  func.func @transform_4(%arg0: i32) -> (i32, i32) {
    %c0_i32 = arith.constant 0 : i32
    %c0_i32_0 = arith.constant 0 : i32
    %c0_i32_1 = arith.constant 0 : i32
    return %c0_i32, %c0_i32_0 : i32, i32
  }
  func.func @transform_5(%arg0: i32) -> (i32, i32, i32) {
    %c0_i32 = arith.constant 0 : i32
    %c0_i32_0 = arith.constant 0 : i32
    %c0_i32_1 = arith.constant 0 : i32
    return %arg0, %c0_i32, %c0_i32_0 : i32, i32, i32
  }
  func.func @transform_6(%arg0: i32) -> (i32, i32, i32) {
    %c0_i32 = arith.constant 0 : i32
    %c0_i32_0 = arith.constant 0 : i32
    %c0_i32_1 = arith.constant 0 : i32
    return %arg0, %c0_i32, %c0_i32_0 : i32, i32, i32
  }
  func.func @transform_7(%arg0: i32) -> (i32, i32) {
    %c0_i32 = arith.constant 0 : i32
    %c0_i32_0 = arith.constant 0 : i32
    %c0_i32_1 = arith.constant 0 : i32
    return %c0_i32, %c0_i32_0 : i32, i32
  }
  func.func @transform_8(%arg0: i32) -> (i32, i32) {
    %c0_i32 = arith.constant 0 : i32
    %c0_i32_0 = arith.constant 0 : i32
    %c0_i32_1 = arith.constant 0 : i32
    return %c0_i32, %c0_i32_0 : i32, i32
  }
}

</mosaic_0001>

<llo_original>
// kernel: _lambda_.5
$region0: #{_lambda_.5}
  #allocation0 [shape = 'u32[]', space=smem, size = 0x4, offset = 0x4, fixed_abs, tag = 'smem constant byte address 0x4 - core index']
  #allocation1 [shape = 'u32[72,128]{1,0:T(1,128)}', space=vmem, size = 0x9000, scoped, tag = 'internal scratch']
  %s0 = inlined_call_operand.vmem [shape: bf16[16,64], index: 0, kind: input, shape index: {}]
  %s1 = inlined_call_operand.vmem [shape: bf16[64,8], index: 1, kind: input, shape index: {}]
  %s2 = inlined_call_operand.vmem [shape: f32[1,8], index: 2, kind: input, shape index: {}]
  %s3 = inlined_call_operand.vmem [shape: f32[16,8], index: 3, kind: output, shape index: {}]
  %s4 = sld [smem:[#allocation0]]
  $region22: #{_lambda_.5} parent=0
    _
  %s6 = ssub.s32 1, %s4
  %s7 = scalar_select 0, %s6, %s4
  // Predicated region
  $region2: #{_lambda_.5} parent=0 // pred_check
    _
  $region3: #{_lambda_.5} parent=0 // pred_check_branch
    %9 = sbr.rel (0) target = $region5
  $region4: #{_lambda_.5} parent=0 // pred_region
    _
  $region5: #{_lambda_.5} parent=0 // pred_fallthru
    _
  // Predicated region
  $region6: #{_lambda_.5} parent=0 // pred_check
    _
  $region7: #{_lambda_.5} parent=0 // pred_check_branch
    %11 = sbr.rel (0) target = $region9
  $region8: #{_lambda_.5} parent=0 // pred_region
    _
  $region9: #{_lambda_.5} parent=0 // pred_fallthru
    _
  // Predicated region
  $region10: #{_lambda_.5} parent=0 // pred_check
    _
  $region11: #{_lambda_.5} parent=0 // pred_check_branch
    %13 = sbr.rel (0) target = $region13
  $region12: #{_lambda_.5} parent=0 // pred_region
    _
  $region13: #{_lambda_.5} parent=0 // pred_fallthru
    _
  %v15 = vld [vmem:[%s0] sm:$0xf]
  %v16 = vld [vmem:[%s0 + $0x4] sm:$0xf]
  %v17 = vld [vmem:[%s1] sm:$0xf]
  %v18 = vld [vmem:[%s1 + $0x4] sm:$0xf]
  %v19 = vld [vmem:[%s1 + $0x8] sm:$0xf]
  %v20 = vld [vmem:[%s1 + $0xc] sm:$0xf]
  %v21 = vld [vmem:[%s1 + $0x10] sm:$0xf]
  %v22 = vld [vmem:[%s1 + $0x14] sm:$0xf]
  %v23 = vld [vmem:[%s1 + $0x18] sm:$0xf]
  %v24 = vld [vmem:[%s1 + $0x1c] sm:$0xf]
  %v25 = vld [vmem:[%s2] sm:$0x1]
  %v27 = vperm.slane %v25, 0
  %v31 = vunpack.c.l.b16 %v15
  %v32 = vunpack.c.l.b16 %v16
  %v33 = vpack.c.b16 %v32, %v31
  %v42 = vunpack.c.l.b16 %v17
  %v43 = vunpack.c.l.b16 %v18
  %v44 = vunpack.c.l.b16 %v19
  %v45 = vunpack.c.l.b16 %v20
  %v46 = vunpack.c.l.b16 %v21
  %v47 = vunpack.c.l.b16 %v22
  %v48 = vunpack.c.l.b16 %v23
  %v49 = vunpack.c.l.b16 %v24
  %v50 = vpack.c.b16 %v43, %v42
  %v51 = vpack.c.b16 %v45, %v44
  %v52 = vpack.c.b16 %v47, %v46
  %v53 = vpack.c.b16 %v49, %v48
  %vm58 = vcmask 523264
  %v60 = vsel %vm58, %v33, 0
  %62 = vmatpush.bf16.msra.mxu0 0
  %63 = vmatpush.bf16.msra.mxu0 0
  %64 = vmatpush.bf16.msra.mxu0 0
  %65 = vmatpush.bf16.msra.mxu0 0
  %66 = vmatpush.bf16.msra.mxu0 %v53
  %67 = vmatpush.bf16.msra.mxu0 %v52
  %68 = vmatpush.bf16.msra.mxu0 %v51
  %69 = vmatpush.bf16.msra.mxu0 %v50
  %70 = vmatmul.bf16.gmra.mxu0 %v60
  %v71 = vpop.f32.mrf.mxu0
  %v72 = vadd.f32 %v27, %v71
  %v73 = vpop.f32.mrf.mxu0
  %v74 = vadd.f32 %v27, %v73
  %75 = vdwg.mxu0
  %vm76 = vcmask 64512
  %77 = vst.msk [vmem:[%s3] sm:$0xff] %vm76, %v72
  %78 = vst.msk [vmem:[%s3 + $0x8] sm:$0xff] %vm76, %v74
  // Predicated region
  $region14: #{_lambda_.5} parent=0 // pred_check
    _
  $region15: #{_lambda_.5} parent=0 // pred_check_branch
    %80 = sbr.rel (0) target = $region17
  $region16: #{_lambda_.5} parent=0 // pred_region
    _
  $region17: #{_lambda_.5} parent=0 // pred_fallthru
    _
  // Predicated region
  $region18: #{_lambda_.5} parent=0 // pred_check
    _
  $region19: #{_lambda_.5} parent=0 // pred_check_branch
    %82 = sbr.rel (0) target = $region21
  $region20: #{_lambda_.5} parent=0 // pred_region
    _
  $region21: #{_lambda_.5} parent=0 // pred_fallthru
    _

// kernel: _lambda_.7
$region0: #{_lambda_.7}
  #allocation0 [shape = 'u32[]', space=smem, size = 0x4, offset = 0x4, fixed_abs, tag = 'smem constant byte address 0x4 - core index']
  #allocation1 [shape = 'u32[72,128]{1,0:T(1,128)}', space=vmem, size = 0x9000, scoped, tag = 'internal scratch']
  %s0 = inlined_call_operand.vmem [shape: bf16[16,8], index: 0, kind: input, shape index: {}]
  %s1 = inlined_call_operand.vmem [shape: bf16[8,128], index: 1, kind: input, shape index: {}]
  %s2 = inlined_call_operand.vmem [shape: f32[1,128], index: 2, kind: input, shape index: {}]
  %s3 = inlined_call_operand.vmem [shape: f32[16,128], index: 3, kind: output, shape index: {}]
  %s4 = sld [smem:[#allocation0]]
  $region22: #{_lambda_.7} parent=0
    _
  %s6 = ssub.s32 1, %s4
  %s7 = scalar_select 0, %s6, %s4
  // Predicated region
  $region2: #{_lambda_.7} parent=0 // pred_check
    _
  $region3: #{_lambda_.7} parent=0 // pred_check_branch
    %9 = sbr.rel (0) target = $region5
  $region4: #{_lambda_.7} parent=0 // pred_region
    _
  $region5: #{_lambda_.7} parent=0 // pred_fallthru
    _
  // Predicated region
  $region6: #{_lambda_.7} parent=0 // pred_check
    _
  $region7: #{_lambda_.7} parent=0 // pred_check_branch
    %11 = sbr.rel (0) target = $region9
  $region8: #{_lambda_.7} parent=0 // pred_region
    _
  $region9: #{_lambda_.7} parent=0 // pred_fallthru
    _
  // Predicated region
  $region10: #{_lambda_.7} parent=0 // pred_check
    _
  $region11: #{_lambda_.7} parent=0 // pred_check_branch
    %13 = sbr.rel (0) target = $region13
  $region12: #{_lambda_.7} parent=0 // pred_region
    _
  $region13: #{_lambda_.7} parent=0 // pred_fallthru
    _
  %v15 = vld [vmem:[%s0] sm:$0xf]
  %v16 = vld [vmem:[%s0 + $0x4] sm:$0xf]
  %v17 = vld [vmem:[%s1] sm:$0xf]
  %v18 = vld [vmem:[%s2] sm:$0x1]
  %v20 = vperm.slane %v18, 0
  %v24 = vunpack.c.l.b16 %v15
  %v25 = vunpack.c.l.b16 %v16
  %v26 = vpack.c.b16 %v25, %v24
  %vm27 = vcmask 64512
  %v29 = vsel %vm27, %v26, 0
  %vm31 = vcmask 1043456
  %v33 = vsel %vm31, %v17, 0
  %35 = vmatpush.bf16.msra.mxu0 0
  %36 = vmatpush.bf16.msra.mxu0 0
  %37 = vmatpush.bf16.msra.mxu0 0
  %38 = vmatpush.bf16.msra.mxu0 0
  %39 = vmatpush.bf16.msra.mxu0 0
  %40 = vmatpush.bf16.msra.mxu0 0
  %41 = vmatpush.bf16.msra.mxu0 0
  %42 = vmatpush.bf16.msra.mxu0 %v33
  %43 = vmatmul.bf16.gmra.mxu0 %v29
  %v44 = vpop.f32.mrf.mxu0
  %v45 = vadd.f32 %v20, %v44
  %v46 = vpop.f32.mrf.mxu0
  %v47 = vadd.f32 %v20, %v46
  %48 = vdwg.mxu0
  %49 = vst [vmem:[%s3] sm:$0xff] %v45
  %50 = vst [vmem:[%s3 + $0x8] sm:$0xff] %v47
  // Predicated region
  $region14: #{_lambda_.7} parent=0 // pred_check
    _
  $region15: #{_lambda_.7} parent=0 // pred_check_branch
    %52 = sbr.rel (0) target = $region17
  $region16: #{_lambda_.7} parent=0 // pred_region
    _
  $region17: #{_lambda_.7} parent=0 // pred_fallthru
    _
  // Predicated region
  $region18: #{_lambda_.7} parent=0 // pred_check
    _
  $region19: #{_lambda_.7} parent=0 // pred_check_branch
    %54 = sbr.rel (0) target = $region21
  $region20: #{_lambda_.7} parent=0 // pred_region
    _
  $region21: #{_lambda_.7} parent=0 // pred_fallthru
    _

// kernel: _lambda_.6
$region0: #{_lambda_.6}
  #allocation0 [shape = 'u32[]', space=smem, size = 0x4, offset = 0x4, fixed_abs, tag = 'smem constant byte address 0x4 - core index']
  #allocation1 [shape = 'u32[72,128]{1,0:T(1,128)}', space=vmem, size = 0x9000, scoped, tag = 'internal scratch']
  %s0 = inlined_call_operand.vmem [shape: bf16[16,64], index: 0, kind: input, shape index: {}]
  %s1 = inlined_call_operand.vmem [shape: bf16[64,32], index: 1, kind: input, shape index: {}]
  %s2 = inlined_call_operand.vmem [shape: f32[1,32], index: 2, kind: input, shape index: {}]
  %s3 = inlined_call_operand.vmem [shape: f32[16,32], index: 3, kind: output, shape index: {}]
  %s4 = sld [smem:[#allocation0]]
  $region22: #{_lambda_.6} parent=0
    _
  %s6 = ssub.s32 1, %s4
  %s7 = scalar_select 0, %s6, %s4
  // Predicated region
  $region2: #{_lambda_.6} parent=0 // pred_check
    _
  $region3: #{_lambda_.6} parent=0 // pred_check_branch
    %9 = sbr.rel (0) target = $region5
  $region4: #{_lambda_.6} parent=0 // pred_region
    _
  $region5: #{_lambda_.6} parent=0 // pred_fallthru
    _
  // Predicated region
  $region6: #{_lambda_.6} parent=0 // pred_check
    _
  $region7: #{_lambda_.6} parent=0 // pred_check_branch
    %11 = sbr.rel (0) target = $region9
  $region8: #{_lambda_.6} parent=0 // pred_region
    _
  $region9: #{_lambda_.6} parent=0 // pred_fallthru
    _
  // Predicated region
  $region10: #{_lambda_.6} parent=0 // pred_check
    _
  $region11: #{_lambda_.6} parent=0 // pred_check_branch
    %13 = sbr.rel (0) target = $region13
  $region12: #{_lambda_.6} parent=0 // pred_region
    _
  $region13: #{_lambda_.6} parent=0 // pred_fallthru
    _
  %v15 = vld [vmem:[%s0] sm:$0xf]
  %v16 = vld [vmem:[%s0 + $0x4] sm:$0xf]
  %v17 = vld [vmem:[%s1] sm:$0xf]
  %v18 = vld [vmem:[%s1 + $0x4] sm:$0xf]
  %v19 = vld [vmem:[%s1 + $0x8] sm:$0xf]
  %v20 = vld [vmem:[%s1 + $0xc] sm:$0xf]
  %v21 = vld [vmem:[%s1 + $0x10] sm:$0xf]
  %v22 = vld [vmem:[%s1 + $0x14] sm:$0xf]
  %v23 = vld [vmem:[%s1 + $0x18] sm:$0xf]
  %v24 = vld [vmem:[%s1 + $0x1c] sm:$0xf]
  %v25 = vld [vmem:[%s2] sm:$0x1]
  %v27 = vperm.slane %v25, 0
  %v31 = vunpack.c.l.b16 %v15
  %v32 = vunpack.c.l.b16 %v16
  %v33 = vpack.c.b16 %v32, %v31
  %v42 = vunpack.c.l.b16 %v17
  %v43 = vunpack.c.l.b16 %v18
  %v44 = vunpack.c.l.b16 %v19
  %v45 = vunpack.c.l.b16 %v20
  %v46 = vunpack.c.l.b16 %v21
  %v47 = vunpack.c.l.b16 %v22
  %v48 = vunpack.c.l.b16 %v23
  %v49 = vunpack.c.l.b16 %v24
  %v50 = vpack.c.b16 %v43, %v42
  %v51 = vpack.c.b16 %v45, %v44
  %v52 = vpack.c.b16 %v47, %v46
  %v53 = vpack.c.b16 %v49, %v48
  %vm58 = vcmask 523264
  %v60 = vsel %vm58, %v33, 0
  %62 = vmatpush.bf16.msra.mxu0 0
  %63 = vmatpush.bf16.msra.mxu0 0
  %64 = vmatpush.bf16.msra.mxu0 0
  %65 = vmatpush.bf16.msra.mxu0 0
  %66 = vmatpush.bf16.msra.mxu0 %v53
  %67 = vmatpush.bf16.msra.mxu0 %v52
  %68 = vmatpush.bf16.msra.mxu0 %v51
  %69 = vmatpush.bf16.msra.mxu0 %v50
  %70 = vmatmul.bf16.gmra.mxu0 %v60
  %v71 = vpop.f32.mrf.mxu0
  %v72 = vadd.f32 %v27, %v71
  %v73 = vpop.f32.mrf.mxu0
  %v74 = vadd.f32 %v27, %v73
  %75 = vdwg.mxu0
  %vm76 = vcmask 261120
  %77 = vst.msk [vmem:[%s3] sm:$0xff] %vm76, %v72
  %78 = vst.msk [vmem:[%s3 + $0x8] sm:$0xff] %vm76, %v74
  // Predicated region
  $region14: #{_lambda_.6} parent=0 // pred_check
    _
  $region15: #{_lambda_.6} parent=0 // pred_check_branch
    %80 = sbr.rel (0) target = $region17
  $region16: #{_lambda_.6} parent=0 // pred_region
    _
  $region17: #{_lambda_.6} parent=0 // pred_fallthru
    _
  // Predicated region
  $region18: #{_lambda_.6} parent=0 // pred_check
    _
  $region19: #{_lambda_.6} parent=0 // pred_check_branch
    %82 = sbr.rel (0) target = $region21
  $region20: #{_lambda_.6} parent=0 // pred_region
    _
  $region21: #{_lambda_.6} parent=0 // pred_fallthru
    _

// kernel: _lambda_.9
$region0: #{_lambda_.9}
  #allocation0 [shape = 'u32[]', space=smem, size = 0x4, offset = 0x4, fixed_abs, tag = 'smem constant byte address 0x4 - core index']
  #allocation1 [shape = 'u32[72,128]{1,0:T(1,128)}', space=vmem, size = 0x9000, scoped, tag = 'internal scratch']
  %s0 = inlined_call_operand.vmem [shape: f32[2,8,32], index: 0, kind: input, shape index: {}]
  %s1 = inlined_call_operand.vmem [shape: f32[2,8,4], index: 1, kind: input, shape index: {}]
  %s2 = inlined_call_operand.vmem [shape: f32[2,8,1], index: 2, kind: input, shape index: {}]
  %s3 = inlined_call_operand.vmem [shape: bf16[32,8], index: 3, kind: input, shape index: {}]
  %s4 = inlined_call_operand.vmem [shape: f32[1,8], index: 4, kind: input, shape index: {}]
  %s5 = inlined_call_operand.vmem [shape: f32[2,8,8], index: 5, kind: output, shape index: {0}]
  %s6 = inlined_call_operand.vmem [shape: f32[2,8,4], index: 6, kind: output, shape index: {1}]
  %s7 = inlined_call_operand.hbm [shape: f32[1,1], index: 7, kind: output, shape index: {2}]
  %s8 = inlined_call_operand.hbm [shape: f32[1,1], index: 8, kind: output, shape index: {3}]
  %9 = xla_tuple %s5, %s6, %s7, %s8
  %s10 = sld [smem:[#allocation0]]
  $region81: #{_lambda_.9} parent=0
    _
  %s12 = ssub.s32 1, %s10
  %s13 = scalar_select 0, %s12, %s10
  $region1: #{_lambda_.9} parent=0
    #allocation2 [shape = 'u8[512]{0}', space=vmem, size = 0x400, scoped, tag = 'output window, operand 2, single buffered']
    #allocation3 [shape = 's32[2]{0}', space=sflag, size = 0x8, scoped, tag = 'scoped memory for _lambda_.9']
    #allocation4 [shape = 'u8[512]{0}', space=vmem, size = 0x400, scoped, tag = 'output window, operand 3, single buffered']
    #allocation5 [shape = 's32[1]{0}', space=sflag, size = 0x4, scoped, tag = 'scoped memory for _lambda_.9']
    %14 = vsyncpa [#allocation3], 0
    %15 = vsyncpa [#allocation5], 0
    loop: start=0, step=1, limit=4
    $region2: #{_lambda_.9} parent=1 // loop_pre_header
      _
    $region3: #{_lambda_.9} parent=1 // loop_header
      %s17 = sphi 0, %s21
      %p18 = scmp.ge.s32.totalorder %s17, 4
      %s27 = sphi 0, %s29
      %s30 = sphi 0, %s27
      %s31 = sphi 0, %s30
      %s47 = sphi 0, %s31
      %s53 = sphi 0, %s55
      %s56 = sphi 0, %s53
      %s57 = sphi 0, %s56
      %s73 = sphi 0, %s57
      %s79 = sphi 0, %s81
      %s82 = sphi 0, %s79
      %s83 = sphi 0, %s82
      %s99 = sphi 0, %s83
      %s103 = sphi 0, %s103
      %s105 = sphi 0, %s103
      %s106 = sphi 0, %s105
      %s120 = sphi 0, %s106
      %s124 = sphi 0, %s124
      %s126 = sphi 0, %s124
      %s127 = sphi 0, %s126
      %s141 = sphi 0, %s127
      %s147 = sphi 0, %s149
      %s150 = sphi 0, %s147
      %s151 = sphi 0, %s150
      %s167 = sphi 0, %s151
      %s173 = sphi 0, %s175
      %s176 = sphi 0, %s173
      %s177 = sphi 0, %s176
      %s193 = sphi 0, %s177
      %s197 = sphi 0, %s197
      %s199 = sphi 0, %s197
      %s200 = sphi 0, %s199
      %s214 = sphi 0, %s200
      %s218 = sphi 0, %s218
      %s220 = sphi 0, %s218
      %s221 = sphi 0, %s220
      %s235 = sphi 0, %s221
    $region4: #{_lambda_.9} parent=1 // loop_header_branch
      %20 = sbr.rel (%p18) target = $region8
    $region5: #{_lambda_.9} parent=1 // loop_body
      %s22 = ssub.s32 %s17, 1
      %s23 = ssub.s32 %s17, 2
      %s24 = sadd.s32 %s17, 1
      %s25 = ssub.s32 %s17, %s24
      %p26 = scmp.eq.s32.totalorder %s25, 0
      %s28 = sadd.s32 %s27, 1
      %s29 = scalar_select %p26, %s27, %s28
      %p32 = pneg %p26
      %p33 = scmp.eq.s32.totalorder %s17, 1
      %p34 = por %p32, %p33
      %p35 = scmp.ne.s32.totalorder %s27, %s30
      %p36 = scmp.eq.s32.totalorder %s17, 0
      %p37 = por %p35, %p36
      %p38 = scmp.ne.s32.totalorder %s27, %s30
      %p39 = scmp.eq.s32.totalorder %s22, 1
      %p40 = por %p38, %p39
      %p41 = scmp.ne.s32.totalorder %s30, %s31
      %p42 = scmp.eq.s32.totalorder %s22, 0
      %p43 = por %p41, %p42
      %p44 = scmp.ne.s32.totalorder %s30, %s31
      %p45 = scmp.eq.s32.totalorder %s23, 1
      %p46 = por %p44, %p45
      %p48 = scmp.ne.s32.totalorder %s31, %s47
      %p49 = scmp.eq.s32.totalorder %s23, 0
      %p50 = por %p48, %p49
      %s51 = ssub.s32 %s17, %s24
      %p52 = scmp.eq.s32.totalorder %s51, 0
      %s54 = sadd.s32 %s53, 1
      %s55 = scalar_select %p52, %s53, %s54
      %p58 = pneg %p52
      %p59 = scmp.eq.s32.totalorder %s17, 1
      %p60 = por %p58, %p59
      %p61 = scmp.ne.s32.totalorder %s53, %s56
      %p62 = scmp.eq.s32.totalorder %s17, 0
      %p63 = por %p61, %p62
      %p64 = scmp.ne.s32.totalorder %s53, %s56
      %p65 = scmp.eq.s32.totalorder %s22, 1
      %p66 = por %p64, %p65
      %p67 = scmp.ne.s32.totalorder %s56, %s57
      %p68 = scmp.eq.s32.totalorder %s22, 0
      %p69 = por %p67, %p68
      %p70 = scmp.ne.s32.totalorder %s56, %s57
      %p71 = scmp.eq.s32.totalorder %s23, 1
      %p72 = por %p70, %p71
      %p74 = scmp.ne.s32.totalorder %s57, %s73
      %p75 = scmp.eq.s32.totalorder %s23, 0
      %p76 = por %p74, %p75
      %s77 = ssub.s32 %s17, %s24
      %p78 = scmp.eq.s32.totalorder %s77, 0
      %s80 = sadd.s32 %s79, 1
      %s81 = scalar_select %p78, %s79, %s80
      %p84 = pneg %p78
      %p85 = scmp.eq.s32.totalorder %s17, 1
      %p86 = por %p84, %p85
      %p87 = scmp.ne.s32.totalorder %s79, %s82
      %p88 = scmp.eq.s32.totalorder %s17, 0
      %p89 = por %p87, %p88
      %p90 = scmp.ne.s32.totalorder %s79, %s82
      %p91 = scmp.eq.s32.totalorder %s22, 1
      %p92 = por %p90, %p91
      %p93 = scmp.ne.s32.totalorder %s82, %s83
      %p94 = scmp.eq.s32.totalorder %s22, 0
      %p95 = por %p93, %p94
      %p96 = scmp.ne.s32.totalorder %s82, %s83
      %p97 = scmp.eq.s32.totalorder %s23, 1
      %p98 = por %p96, %p97
      %p100 = scmp.ne.s32.totalorder %s83, %s99
      %p101 = scmp.eq.s32.totalorder %s23, 0
      %p102 = por %p100, %p101
      %s104 = sadd.s32 %s103, 1
      %p107 = scmp.eq.s32.totalorder %s17, 1
      %p108 = scmp.ne.s32.totalorder %s103, %s105
      %p109 = scmp.eq.s32.totalorder %s17, 0
      %p110 = por %p108, %p109
      %p111 = scmp.ne.s32.totalorder %s103, %s105
      %p112 = scmp.eq.s32.totalorder %s22, 1
      %p113 = por %p111, %p112
      %p114 = scmp.ne.s32.totalorder %s105, %s106
      %p115 = scmp.eq.s32.totalorder %s22, 0
      %p116 = por %p114, %p115
      %p117 = scmp.ne.s32.totalorder %s105, %s106
      %p118 = scmp.eq.s32.totalorder %s23, 1
      %p119 = por %p117, %p118
      %p121 = scmp.ne.s32.totalorder %s106, %s120
      %p122 = scmp.eq.s32.totalorder %s23, 0
      %p123 = por %p121, %p122
      %s125 = sadd.s32 %s124, 1
      %p128 = scmp.eq.s32.totalorder %s17, 1
      %p129 = scmp.ne.s32.totalorder %s124, %s126
      %p130 = scmp.eq.s32.totalorder %s17, 0
      %p131 = por %p129, %p130
      %p132 = scmp.ne.s32.totalorder %s124, %s126
      %p133 = scmp.eq.s32.totalorder %s22, 1
      %p134 = por %p132, %p133
      %p135 = scmp.ne.s32.totalorder %s126, %s127
      %p136 = scmp.eq.s32.totalorder %s22, 0
      %p137 = por %p135, %p136
      %p138 = scmp.ne.s32.totalorder %s126, %s127
      %p139 = scmp.eq.s32.totalorder %s23, 1
      %p140 = por %p138, %p139
      %p142 = scmp.ne.s32.totalorder %s127, %s141
      %p143 = scmp.eq.s32.totalorder %s23, 0
      %p144 = por %p142, %p143
      %s145 = ssub.s32 %s17, %s24
      %p146 = scmp.eq.s32.totalorder %s145, 0
      %s148 = sadd.s32 %s147, 1
      %s149 = scalar_select %p146, %s147, %s148
      %p152 = pneg %p146
      %p153 = scmp.eq.s32.totalorder %s17, 1
      %p154 = por %p152, %p153
      %p155 = scmp.ne.s32.totalorder %s147, %s150
      %p156 = scmp.eq.s32.totalorder %s17, 0
      %p157 = por %p155, %p156
      %p158 = scmp.ne.s32.totalorder %s147, %s150
      %p159 = scmp.eq.s32.totalorder %s22, 1
      %p160 = por %p158, %p159
      %p161 = scmp.ne.s32.totalorder %s150, %s151
      %p162 = scmp.eq.s32.totalorder %s22, 0
      %p163 = por %p161, %p162
      %p164 = scmp.ne.s32.totalorder %s150, %s151
      %p165 = scmp.eq.s32.totalorder %s23, 1
      %p166 = por %p164, %p165
      %p168 = scmp.ne.s32.totalorder %s151, %s167
      %p169 = scmp.eq.s32.totalorder %s23, 0
      %p170 = por %p168, %p169
      %s171 = ssub.s32 %s17, %s24
      %p172 = scmp.eq.s32.totalorder %s171, 0
      %s174 = sadd.s32 %s173, 1
      %s175 = scalar_select %p172, %s173, %s174
      %p178 = pneg %p172
      %p179 = scmp.eq.s32.totalorder %s17, 1
      %p180 = por %p178, %p179
      %p181 = scmp.ne.s32.totalorder %s173, %s176
      %p182 = scmp.eq.s32.totalorder %s17, 0
      %p183 = por %p181, %p182
      %p184 = scmp.ne.s32.totalorder %s173, %s176
      %p185 = scmp.eq.s32.totalorder %s22, 1
      %p186 = por %p184, %p185
      %p187 = scmp.ne.s32.totalorder %s176, %s177
      %p188 = scmp.eq.s32.totalorder %s22, 0
      %p189 = por %p187, %p188
      %p190 = scmp.ne.s32.totalorder %s176, %s177
      %p191 = scmp.eq.s32.totalorder %s23, 1
      %p192 = por %p190, %p191
      %p194 = scmp.ne.s32.totalorder %s177, %s193
      %p195 = scmp.eq.s32.totalorder %s23, 0
      %p196 = por %p194, %p195
      %s198 = sadd.s32 %s197, 1
      %p201 = scmp.eq.s32.totalorder %s17, 1
      %p202 = scmp.ne.s32.totalorder %s197, %s199
      %p203 = scmp.eq.s32.totalorder %s17, 0
      %p204 = por %p202, %p203
      %p205 = scmp.ne.s32.totalorder %s197, %s199
      %p206 = scmp.eq.s32.totalorder %s22, 1
      %p207 = por %p205, %p206
      %p208 = scmp.ne.s32.totalorder %s199, %s200
      %p209 = scmp.eq.s32.totalorder %s22, 0
      %p210 = por %p208, %p209
      %p211 = scmp.ne.s32.totalorder %s199, %s200
      %p212 = scmp.eq.s32.totalorder %s23, 1
      %p213 = por %p211, %p212
      %p215 = scmp.ne.s32.totalorder %s200, %s214
      %p216 = scmp.eq.s32.totalorder %s23, 0
      %p217 = por %p215, %p216
      %s219 = sadd.s32 %s218, 1
      %p222 = scmp.eq.s32.totalorder %s17, 1
      %p223 = scmp.ne.s32.totalorder %s218, %s220
      %p224 = scmp.eq.s32.totalorder %s17, 0
      %p225 = por %p223, %p224
      %p226 = scmp.ne.s32.totalorder %s218, %s220
      %p227 = scmp.eq.s32.totalorder %s22, 1
      %p228 = por %p226, %p227
      %p229 = scmp.ne.s32.totalorder %s220, %s221
      %p230 = scmp.eq.s32.totalorder %s22, 0
      %p231 = por %p229, %p230
      %p232 = scmp.ne.s32.totalorder %s220, %s221
      %p233 = scmp.eq.s32.totalorder %s23, 1
      %p234 = por %p232, %p233
      %p236 = scmp.ne.s32.totalorder %s221, %s235
      %p237 = scmp.eq.s32.totalorder %s23, 0
      %p238 = por %p236, %p237
      %p239 = scmp.le.s32.totalorder 1, %s17
      %p240 = scmp.lt.s32.totalorder %s17, 3
      %p241 = pnand %p239, %p240
      %p242 = pneg %p241
      // Predicated region
      $region9: #{_lambda_.9} parent=5 // pred_check
        _
      $region10: #{_lambda_.9} parent=5 // pred_check_branch
        %244 = sbr.rel (%p241) target = $region12
      $region11: #{_lambda_.9} parent=5 // pred_region
        %s245 = ssub.s32 %s17, 1
        // Predicated region
        $region13: #{_lambda_.9} parent=11 // pred_check
          %p246 = pneg %p116
        $region14: #{_lambda_.9} parent=11 // pred_check_branch
          %248 = sbr.rel (%p246) target = $region16
        $region15: #{_lambda_.9} parent=11 // pred_region
          _
        $region16: #{_lambda_.9} parent=11 // pred_fallthru
          _
        // Predicated region
        $region17: #{_lambda_.9} parent=11 // pred_check
          %p249 = pneg %p137
        $region18: #{_lambda_.9} parent=11 // pred_check_branch
          %251 = sbr.rel (%p249) target = $region20
        $region19: #{_lambda_.9} parent=11 // pred_region
          _
        $region20: #{_lambda_.9} parent=11 // pred_fallthru
          _
      $region12: #{_lambda_.9} parent=5 // pred_fallthru
        _
      %p252 = scmp.lt.s32.totalorder %s17, 2
      // Predicated region
      $region21: #{_lambda_.9} parent=5 // pred_check
        %p253 = pneg %p252
      $region22: #{_lambda_.9} parent=5 // pred_check_branch
        %255 = sbr.rel (%p253) target = $region24
      $region23: #{_lambda_.9} parent=5 // pred_region
        // Predicated region
        $region25: #{_lambda_.9} parent=23 // pred_check
          %p256 = pneg %p37
        $region26: #{_lambda_.9} parent=23 // pred_check_branch
          %258 = sbr.rel (%p256) target = $region28
        $region27: #{_lambda_.9} parent=23 // pred_region
          %p259 = scmp.lt.s32.totalorder %s17, 1
          %s260 = scalar_select %p259, %s17, 1
          %s261 = smul.addr %s260, 8
          %s262 = scalar_lea.vmem %s0, %s261
        $region28: #{_lambda_.9} parent=23 // pred_fallthru
          _
        // Predicated region
        $region29: #{_lambda_.9} parent=23 // pred_check
          %p263 = pneg %p63
        $region30: #{_lambda_.9} parent=23 // pred_check_branch
          %265 = sbr.rel (%p263) target = $region32
        $region31: #{_lambda_.9} parent=23 // pred_region
          %p266 = scmp.lt.s32.totalorder %s17, 1
          %s267 = scalar_select %p266, %s17, 1
          %s268 = smul.addr %s267, 8
          %s269 = scalar_lea.vmem %s1, %s268
        $region32: #{_lambda_.9} parent=23 // pred_fallthru
          _
        // Predicated region
        $region33: #{_lambda_.9} parent=23 // pred_check
          %p270 = pneg %p89
        $region34: #{_lambda_.9} parent=23 // pred_check_branch
          %272 = sbr.rel (%p270) target = $region36
        $region35: #{_lambda_.9} parent=23 // pred_region
          %p273 = scmp.lt.s32.totalorder %s17, 1
          %s274 = scalar_select %p273, %s17, 1
          %s275 = smul.addr %s274, 8
          %s276 = scalar_lea.vmem %s2, %s275
        $region36: #{_lambda_.9} parent=23 // pred_fallthru
          _
      $region24: #{_lambda_.9} parent=5 // pred_fallthru
        _
      %p277 = scmp.le.s32.totalorder 1, %s17
      %p278 = scmp.lt.s32.totalorder %s17, 3
      %p279 = pnand %p277, %p278
      %p280 = pneg %p279
      // Predicated region
      $region37: #{_lambda_.9} parent=5 // pred_check
        _
      $region38: #{_lambda_.9} parent=5 // pred_check_branch
        %282 = sbr.rel (%p279) target = $region40
      $region39: #{_lambda_.9} parent=5 // pred_region
        %s283 = ssub.s32 %s17, 1
        %p284 = scmp.lt.s32.totalorder %s22, 1
        %s285 = scalar_select %p284, %s22, 1
        %s286 = smul.addr %s285, 8
        %s287 = scalar_lea.vmem %s0, %s286
        %p288 = pneg %p43
        %p289 = pneg %p40
        %p290 = scmp.lt.s32.totalorder %s22, 1
        %s291 = scalar_select %p290, %s22, 1
        %s292 = smul.addr %s291, 8
        %s293 = scalar_lea.vmem %s1, %s292
        %p294 = pneg %p69
        %p295 = pneg %p66
        %p296 = scmp.lt.s32.totalorder %s22, 1
        %s297 = scalar_select %p296, %s22, 1
        %s298 = smul.addr %s297, 8
        %s299 = scalar_lea.vmem %s2, %s298
        %p300 = pneg %p95
        %p301 = pneg %p92
        %p302 = pneg %p116
        %p303 = pneg %p113
        %p304 = pneg %p137
        %p305 = pneg %p134
        %p306 = pneg %p163
        %p307 = pneg %p160
        %p308 = scmp.lt.s32.totalorder %s22, 1
        %s309 = scalar_select %p308, %s22, 1
        %s310 = smul.addr %s309, 8
        %s311 = scalar_lea.vmem %s5, %s310
        %p312 = pneg %p189
        %p313 = pneg %p186
        %p314 = scmp.lt.s32.totalorder %s22, 1
        %s315 = scalar_select %p314, %s22, 1
        %s316 = smul.addr %s315, 8
        %s317 = scalar_lea.vmem %s6, %s316
        %p318 = pneg %p210
        %p319 = pneg %p207
        %p320 = pneg %p231
        %p321 = pneg %p228
        %p322 = scmp.lt.s32.totalorder %s22, 1
        %s323 = scalar_select %p322, %s22, 1
        %s324 = smul.addr %s323, 8
        %s325 = scalar_lea.vmem %s0, %s324
        %p326 = scmp.lt.s32.totalorder %s22, 1
        %s327 = scalar_select %p326, %s22, 1
        %s328 = smul.addr %s327, 8
        %s329 = scalar_lea.vmem %s1, %s328
        %p330 = scmp.lt.s32.totalorder %s22, 1
        %s331 = scalar_select %p330, %s22, 1
        %s332 = smul.addr %s331, 8
        %s333 = scalar_lea.vmem %s2, %s332
        %p334 = scmp.lt.s32.totalorder %s22, 1
        %s335 = scalar_select %p334, %s22, 1
        %s336 = smul.addr %s335, 8
        %s337 = scalar_lea.vmem %s5, %s336
        %p338 = scmp.lt.s32.totalorder %s22, 1
        %s339 = scalar_select %p338, %s22, 1
        %s340 = smul.addr %s339, 8
        %s341 = scalar_lea.vmem %s6, %s340
        %p343 = scmp.eq.s32.totalorder %s22, 0
        // Predicated region
        $region41: #{_lambda_.9} parent=39 // pred_check
          %p344 = pneg %p343
        $region42: #{_lambda_.9} parent=39 // pred_check_branch
          %346 = sbr.rel (%p344) target = $region44
        $region43: #{_lambda_.9} parent=39 // pred_region
          %vm347 = vcmask 0
          %348 = vst.msk [vmem:[#allocation2] sm:$0x1] %vm347, 0.0
          %349 = vst.msk [vmem:[#allocation4] sm:$0x1] %vm347, 0.0
        $region44: #{_lambda_.9} parent=39 // pred_fallthru
          _
        %v350 = vld [vmem:[%s325] sm:$0xff]
        %v351 = vpack.c.bf16 %v350, %v350
        %v352 = vld [vmem:[%s3] sm:$0xf]
        %v353 = vld [vmem:[%s3 + $0x4] sm:$0xf]
        %v354 = vld [vmem:[%s3 + $0x8] sm:$0xf]
        %v355 = vld [vmem:[%s3 + $0xc] sm:$0xf]
        %v356 = vld [vmem:[%s4] sm:$0x1]
        %v358 = vperm.slane %v356, 0
        %v364 = vunpack.c.l.b16 %v352
        %v365 = vunpack.c.l.b16 %v353
        %v366 = vunpack.c.l.b16 %v354
        %v367 = vunpack.c.l.b16 %v355
        %v368 = vpack.c.b16 %v365, %v364
        %v369 = vpack.c.b16 %v367, %v366
        %vm372 = vcmask 261120
        %v374 = vsel %vm372, %v351, 0
        %376 = vmatpush.bf16.msra.mxu0 0
        %377 = vmatpush.bf16.msra.mxu0 0
        %378 = vmatpush.bf16.msra.mxu0 0
        %379 = vmatpush.bf16.msra.mxu0 0
        %380 = vmatpush.bf16.msra.mxu0 0
        %381 = vmatpush.bf16.msra.mxu0 0
        %382 = vmatpush.bf16.msra.mxu0 %v369
        %383 = vmatpush.bf16.msra.mxu0 %v368
        %384 = vmatmul.bf16.gmra.mxu0 %v374
        %v385 = vpop.f32.mrf.mxu0
        %v386 = vadd.f32 %v358, %v385
        %v387 = vpop.f32.mrf.mxu0
        %388 = vdwg.mxu0
        %v389 = vmul.f32 %v386, 1.442695
        %v390 = vpow.pop %v389
        %v391 = vld [vmem:[%s329] sm:$0xff]
        %393 = vrot.lane.b32.xlu0 %v390, 124
        %v394 = vpop.permute.xlu0 %393
        %v396 = vmul.f32 %v391, %v394
        %v397 = vadd.f32 %v386, %v396
        %vm398 = vcmask 64512
        %399 = vst.msk [vmem:[%s337] sm:$0xff] %vm398, %v386
        %vm400 = vcmask 31744
        %401 = vst.msk [vmem:[%s341] sm:$0xff] %vm400, %v397
        %v402 = vld [vmem:[%s333] sm:$0xff]
        %v403 = vsub.f32 0.0, %v386
        %v404 = vmul.f32 %v390, %v390
        %v405 = vmul.f32 %v386, %v386
        %407 = vrot.lane.b32.xlu0 %v405, 4
        %v408 = vpop.permute.xlu0 %407
        %v410 = vadd.f32 %v404, %v408
        %v411 = vmul.f32 %v410, 0.5
        %v412 = vadd.f32 %v403, %v411
        %v413 = vsub.f32 %v412, 0.5
        %415 = vset.pattern.permute.xlu0 0
        %416 = vperm.xlu0 %415, %v402
        %v417 = vpop.permute.xlu0 %416
        %v419 = vmul.f32 %v413, %v417
        %v420 = vld [vmem:[#allocation2] sm:$0x1]
        %422 = vrot.lane.b32.xlu0 %v419, 124
        %v423 = vpop.permute.xlu0 %422
        %v425 = vsel %vm400, %v423, 0.0
        %426 = vadd.xlane.f32.xlu0 %v425
        %v427 = vpop.xlane.xlu0 %426
        %v428 = vrot.slane %v427, 4
        %v429 = vadd.f32 %v427, %v428
        %v430 = vrot.slane %v429, 2
        %v431 = vadd.f32 %v429, %v430
        %v432 = vrot.slane %v431, 1
        %v433 = vadd.f32 %v431, %v432
        %s434 = vtos %v433
        %v435 = vstv %s434
        %v436 = vadd.f32 %v420, %v435
        %vm437 = vcmask 0
        %438 = vst.msk [vmem:[#allocation2] sm:$0x1] %vm437, %v436
        %v439 = vld [vmem:[#allocation4] sm:$0x1]
        %vm440 = vcmask 7168
        %v441 = vsel %vm440, %v402, 0.0
        %442 = vadd.xlane.f32.xlu0 %v441
        %v443 = vpop.xlane.xlu0 %442
        %v444 = vrot.slane %v443, 4
        %v445 = vadd.f32 %v443, %v444
        %v446 = vrot.slane %v445, 2
        %v447 = vadd.f32 %v445, %v446
        %v448 = vrot.slane %v447, 1
        %v449 = vadd.f32 %v447, %v448
        %s450 = vtos %v449
        %v451 = vstv %s450
        %v452 = vadd.f32 %v439, %v451
        %453 = vst.msk [vmem:[#allocation4] sm:$0x1] %vm437, %v452
        %p454 = scmp.lt.s32.totalorder %s22, 1
        %s455 = scalar_select %p454, %s22, 1
        %s456 = smul.addr %s455, 8
        %s457 = scalar_lea.vmem %s5, %s456
        %p458 = scmp.lt.s32.totalorder %s22, 1
        %s459 = scalar_select %p458, %s22, 1
        %s460 = smul.addr %s459, 8
        %s461 = scalar_lea.vmem %s6, %s460
        // Predicated region
        $region45: #{_lambda_.9} parent=39 // pred_check
          %p462 = pneg %p160
        $region46: #{_lambda_.9} parent=39 // pred_check_branch
          %464 = sbr.rel (%p462) target = $region48
        $region47: #{_lambda_.9} parent=39 // pred_region
          _
        $region48: #{_lambda_.9} parent=39 // pred_fallthru
          _
        // Predicated region
        $region49: #{_lambda_.9} parent=39 // pred_check
          %p465 = pneg %p186
        $region50: #{_lambda_.9} parent=39 // pred_check_branch
          %467 = sbr.rel (%p465) target = $region52
        $region51: #{_lambda_.9} parent=39 // pred_region
          _
        $region52: #{_lambda_.9} parent=39 // pred_fallthru
          _
        // Predicated region
        $region53: #{_lambda_.9} parent=39 // pred_check
          %p468 = pneg %p207
        $region54: #{_lambda_.9} parent=39 // pred_check_branch
          %470 = sbr.rel (%p468) target = $region56
        $region55: #{_lambda_.9} parent=39 // pred_region
          %472 = vsyncadd [#allocation3], 0
          %s474 = sshll.u32 [#allocation2], 4
          %s475 = int_to_ptr.vmem [resolvable:$true] %s474
          %s476 = sshll.u32 %s7, 4
          %s477 = int_to_ptr.hbm [resolvable:$true] %s476
          %479 = dma.vmem_to_hbm [thread:$0]  %s475, 16, %s477, [#allocation3]
        $region56: #{_lambda_.9} parent=39 // pred_fallthru
          _
        // Predicated region
        $region57: #{_lambda_.9} parent=39 // pred_check
          %p480 = pneg %p228
        $region58: #{_lambda_.9} parent=39 // pred_check_branch
          %482 = sbr.rel (%p480) target = $region60
        $region59: #{_lambda_.9} parent=39 // pred_region
          %484 = vsyncadd [#allocation5], 0
          %s486 = sshll.u32 [#allocation4], 4
          %s487 = int_to_ptr.vmem [resolvable:$true] %s486
          %s488 = sshll.u32 %s8, 4
          %s489 = int_to_ptr.hbm [resolvable:$true] %s488
          %491 = dma.vmem_to_hbm [thread:$0]  %s487, 16, %s489, [#allocation5]
        $region60: #{_lambda_.9} parent=39 // pred_fallthru
          _
        // Predicated region
        $region61: #{_lambda_.9} parent=39 // pred_check
          %p492 = pneg %p207
        $region62: #{_lambda_.9} parent=39 // pred_check_branch
          %494 = sbr.rel (%p492) target = $region64
        $region63: #{_lambda_.9} parent=39 // pred_region
          %496 = dma.done [#allocation3], 16
        $region64: #{_lambda_.9} parent=39 // pred_fallthru
          _
        // Predicated region
        $region65: #{_lambda_.9} parent=39 // pred_check
          %p497 = pneg %p228
        $region66: #{_lambda_.9} parent=39 // pred_check_branch
          %499 = sbr.rel (%p497) target = $region68
        $region67: #{_lambda_.9} parent=39 // pred_region
          %501 = dma.done [#allocation5], 16
        $region68: #{_lambda_.9} parent=39 // pred_fallthru
          _
      $region40: #{_lambda_.9} parent=5 // pred_fallthru
        _
      %p502 = scmp.le.s32.totalorder 2, %s17
      // Predicated region
      $region69: #{_lambda_.9} parent=5 // pred_check
        %p503 = pneg %p502
      $region70: #{_lambda_.9} parent=5 // pred_check_branch
        %505 = sbr.rel (%p503) target = $region72
      $region71: #{_lambda_.9} parent=5 // pred_region
        %s506 = ssub.s32 %s17, 2
        // Predicated region
        $region73: #{_lambda_.9} parent=71 // pred_check
          %p507 = pneg %p166
        $region74: #{_lambda_.9} parent=71 // pred_check_branch
          %509 = sbr.rel (%p507) target = $region76
        $region75: #{_lambda_.9} parent=71 // pred_region
          %p510 = scmp.lt.s32.totalorder %s23, 1
          %s511 = scalar_select %p510, %s23, 1
          %s512 = smul.addr %s511, 8
          %s513 = scalar_lea.vmem %s5, %s512
        $region76: #{_lambda_.9} parent=71 // pred_fallthru
          _
        // Predicated region
        $region77: #{_lambda_.9} parent=71 // pred_check
          %p514 = pneg %p192
        $region78: #{_lambda_.9} parent=71 // pred_check_branch
          %516 = sbr.rel (%p514) target = $region80
        $region79: #{_lambda_.9} parent=71 // pred_region
          %p517 = scmp.lt.s32.totalorder %s23, 1
          %s518 = scalar_select %p517, %s23, 1
          %s519 = smul.addr %s518, 8
          %s520 = scalar_lea.vmem %s6, %s519
        $region80: #{_lambda_.9} parent=71 // pred_fallthru
          _
      $region72: #{_lambda_.9} parent=5 // pred_fallthru
        _
    $region6: #{_lambda_.9} parent=1 // loop_footer
      %s21 = sadd.s32 1, %s17
    $region7: #{_lambda_.9} parent=1 // loop_footer_branch
      %16 = sbr.rel target = $region3
    $region8: #{_lambda_.9} parent=1 // loop_exit
      _
    %521 = vsyncpa [#allocation3], 1
    %s522 = scalar_lea.sflag [#allocation3], 1
    %523 = vsyncpa %s522, 1
    %524 = vsyncpa [#allocation5], 1

// kernel: _lambda_.8
$region0: #{_lambda_.8}
  #allocation0 [shape = 'u32[]', space=smem, size = 0x4, offset = 0x4, fixed_abs, tag = 'smem constant byte address 0x4 - core index']
  #allocation1 [shape = 'u32[72,128]{1,0:T(1,128)}', space=vmem, size = 0x9000, scoped, tag = 'internal scratch']
  #allocation2 [shape = 'f32[10,32]{1,0:T(8,128)}', space=vmem, size = 0x2000, scoped, tag = 'scratch operand']
  %s0 = inlined_call_operand.vmem [shape: f32[2,8,32], index: 0, kind: input, shape index: {}]
  %s1 = inlined_call_operand.vmem [shape: f32[2,8,1], index: 1, kind: input, shape index: {}]
  %s2 = inlined_call_operand.vmem [shape: bf16[2,8,128], index: 2, kind: input, shape index: {}]
  %s3 = inlined_call_operand.vmem [shape: bf16[2,96,64], index: 3, kind: input, shape index: {}]
  %s4 = inlined_call_operand.vmem [shape: f32[2,1,64], index: 4, kind: input, shape index: {}]
  %s5 = inlined_call_operand.vmem [shape: bf16[2,32,64], index: 5, kind: input, shape index: {}]
  %s6 = inlined_call_operand.vmem [shape: f32[2,1,64], index: 6, kind: input, shape index: {}]
  %s7 = inlined_call_operand.vmem [shape: f32[2,8,32], index: 7, kind: output, shape index: {}]
  %s8 = sld [smem:[#allocation0]]
  $region61: #{_lambda_.8} parent=0
    _
  %s10 = ssub.s32 1, %s8
  %s11 = scalar_select 0, %s10, %s8
  loop: start=0, step=1, limit=4
  $region2: #{_lambda_.8} parent=0 // loop_pre_header
    _
  $region3: #{_lambda_.8} parent=0 // loop_header
    %s13 = sphi 0, %s17
    %p14 = scmp.ge.s32.totalorder %s13, 4
    %s23 = sphi 0, %s25
    %s26 = sphi 0, %s23
    %s27 = sphi 0, %s26
    %s43 = sphi 0, %s27
    %s49 = sphi 0, %s51
    %s52 = sphi 0, %s49
    %s53 = sphi 0, %s52
    %s69 = sphi 0, %s53
    %s75 = sphi 0, %s77
    %s78 = sphi 0, %s75
    %s79 = sphi 0, %s78
    %s95 = sphi 0, %s79
    %s99 = sphi 0, %s99
    %s101 = sphi 0, %s99
    %s102 = sphi 0, %s101
    %s116 = sphi 0, %s102
    %s120 = sphi 0, %s120
    %s122 = sphi 0, %s120
    %s123 = sphi 0, %s122
    %s137 = sphi 0, %s123
    %s141 = sphi 0, %s141
    %s143 = sphi 0, %s141
    %s144 = sphi 0, %s143
    %s158 = sphi 0, %s144
    %s162 = sphi 0, %s162
    %s164 = sphi 0, %s162
    %s165 = sphi 0, %s164
    %s179 = sphi 0, %s165
    %s185 = sphi 0, %s187
    %s188 = sphi 0, %s185
    %s189 = sphi 0, %s188
    %s205 = sphi 0, %s189
  $region4: #{_lambda_.8} parent=0 // loop_header_branch
    %16 = sbr.rel (%p14) target = $region8
  $region5: #{_lambda_.8} parent=0 // loop_body
    %s18 = ssub.s32 %s13, 1
    %s19 = ssub.s32 %s13, 2
    %s20 = sadd.s32 %s13, 1
    %s21 = ssub.s32 %s13, %s20
    %p22 = scmp.eq.s32.totalorder %s21, 0
    %s24 = sadd.s32 %s23, 1
    %s25 = scalar_select %p22, %s23, %s24
    %p28 = pneg %p22
    %p29 = scmp.eq.s32.totalorder %s13, 1
    %p30 = por %p28, %p29
    %p31 = scmp.ne.s32.totalorder %s23, %s26
    %p32 = scmp.eq.s32.totalorder %s13, 0
    %p33 = por %p31, %p32
    %p34 = scmp.ne.s32.totalorder %s23, %s26
    %p35 = scmp.eq.s32.totalorder %s18, 1
    %p36 = por %p34, %p35
    %p37 = scmp.ne.s32.totalorder %s26, %s27
    %p38 = scmp.eq.s32.totalorder %s18, 0
    %p39 = por %p37, %p38
    %p40 = scmp.ne.s32.totalorder %s26, %s27
    %p41 = scmp.eq.s32.totalorder %s19, 1
    %p42 = por %p40, %p41
    %p44 = scmp.ne.s32.totalorder %s27, %s43
    %p45 = scmp.eq.s32.totalorder %s19, 0
    %p46 = por %p44, %p45
    %s47 = ssub.s32 %s13, %s20
    %p48 = scmp.eq.s32.totalorder %s47, 0
    %s50 = sadd.s32 %s49, 1
    %s51 = scalar_select %p48, %s49, %s50
    %p54 = pneg %p48
    %p55 = scmp.eq.s32.totalorder %s13, 1
    %p56 = por %p54, %p55
    %p57 = scmp.ne.s32.totalorder %s49, %s52
    %p58 = scmp.eq.s32.totalorder %s13, 0
    %p59 = por %p57, %p58
    %p60 = scmp.ne.s32.totalorder %s49, %s52
    %p61 = scmp.eq.s32.totalorder %s18, 1
    %p62 = por %p60, %p61
    %p63 = scmp.ne.s32.totalorder %s52, %s53
    %p64 = scmp.eq.s32.totalorder %s18, 0
    %p65 = por %p63, %p64
    %p66 = scmp.ne.s32.totalorder %s52, %s53
    %p67 = scmp.eq.s32.totalorder %s19, 1
    %p68 = por %p66, %p67
    %p70 = scmp.ne.s32.totalorder %s53, %s69
    %p71 = scmp.eq.s32.totalorder %s19, 0
    %p72 = por %p70, %p71
    %s73 = ssub.s32 %s13, %s20
    %p74 = scmp.eq.s32.totalorder %s73, 0
    %s76 = sadd.s32 %s75, 1
    %s77 = scalar_select %p74, %s75, %s76
    %p80 = pneg %p74
    %p81 = scmp.eq.s32.totalorder %s13, 1
    %p82 = por %p80, %p81
    %p83 = scmp.ne.s32.totalorder %s75, %s78
    %p84 = scmp.eq.s32.totalorder %s13, 0
    %p85 = por %p83, %p84
    %p86 = scmp.ne.s32.totalorder %s75, %s78
    %p87 = scmp.eq.s32.totalorder %s18, 1
    %p88 = por %p86, %p87
    %p89 = scmp.ne.s32.totalorder %s78, %s79
    %p90 = scmp.eq.s32.totalorder %s18, 0
    %p91 = por %p89, %p90
    %p92 = scmp.ne.s32.totalorder %s78, %s79
    %p93 = scmp.eq.s32.totalorder %s19, 1
    %p94 = por %p92, %p93
    %p96 = scmp.ne.s32.totalorder %s79, %s95
    %p97 = scmp.eq.s32.totalorder %s19, 0
    %p98 = por %p96, %p97
    %s100 = sadd.s32 %s99, 1
    %p103 = scmp.eq.s32.totalorder %s13, 1
    %p104 = scmp.ne.s32.totalorder %s99, %s101
    %p105 = scmp.eq.s32.totalorder %s13, 0
    %p106 = por %p104, %p105
    %p107 = scmp.ne.s32.totalorder %s99, %s101
    %p108 = scmp.eq.s32.totalorder %s18, 1
    %p109 = por %p107, %p108
    %p110 = scmp.ne.s32.totalorder %s101, %s102
    %p111 = scmp.eq.s32.totalorder %s18, 0
    %p112 = por %p110, %p111
    %p113 = scmp.ne.s32.totalorder %s101, %s102
    %p114 = scmp.eq.s32.totalorder %s19, 1
    %p115 = por %p113, %p114
    %p117 = scmp.ne.s32.totalorder %s102, %s116
    %p118 = scmp.eq.s32.totalorder %s19, 0
    %p119 = por %p117, %p118
    %s121 = sadd.s32 %s120, 1
    %p124 = scmp.eq.s32.totalorder %s13, 1
    %p125 = scmp.ne.s32.totalorder %s120, %s122
    %p126 = scmp.eq.s32.totalorder %s13, 0
    %p127 = por %p125, %p126
    %p128 = scmp.ne.s32.totalorder %s120, %s122
    %p129 = scmp.eq.s32.totalorder %s18, 1
    %p130 = por %p128, %p129
    %p131 = scmp.ne.s32.totalorder %s122, %s123
    %p132 = scmp.eq.s32.totalorder %s18, 0
    %p133 = por %p131, %p132
    %p134 = scmp.ne.s32.totalorder %s122, %s123
    %p135 = scmp.eq.s32.totalorder %s19, 1
    %p136 = por %p134, %p135
    %p138 = scmp.ne.s32.totalorder %s123, %s137
    %p139 = scmp.eq.s32.totalorder %s19, 0
    %p140 = por %p138, %p139
    %s142 = sadd.s32 %s141, 1
    %p145 = scmp.eq.s32.totalorder %s13, 1
    %p146 = scmp.ne.s32.totalorder %s141, %s143
    %p147 = scmp.eq.s32.totalorder %s13, 0
    %p148 = por %p146, %p147
    %p149 = scmp.ne.s32.totalorder %s141, %s143
    %p150 = scmp.eq.s32.totalorder %s18, 1
    %p151 = por %p149, %p150
    %p152 = scmp.ne.s32.totalorder %s143, %s144
    %p153 = scmp.eq.s32.totalorder %s18, 0
    %p154 = por %p152, %p153
    %p155 = scmp.ne.s32.totalorder %s143, %s144
    %p156 = scmp.eq.s32.totalorder %s19, 1
    %p157 = por %p155, %p156
    %p159 = scmp.ne.s32.totalorder %s144, %s158
    %p160 = scmp.eq.s32.totalorder %s19, 0
    %p161 = por %p159, %p160
    %s163 = sadd.s32 %s162, 1
    %p166 = scmp.eq.s32.totalorder %s13, 1
    %p167 = scmp.ne.s32.totalorder %s162, %s164
    %p168 = scmp.eq.s32.totalorder %s13, 0
    %p169 = por %p167, %p168
    %p170 = scmp.ne.s32.totalorder %s162, %s164
    %p171 = scmp.eq.s32.totalorder %s18, 1
    %p172 = por %p170, %p171
    %p173 = scmp.ne.s32.totalorder %s164, %s165
    %p174 = scmp.eq.s32.totalorder %s18, 0
    %p175 = por %p173, %p174
    %p176 = scmp.ne.s32.totalorder %s164, %s165
    %p177 = scmp.eq.s32.totalorder %s19, 1
    %p178 = por %p176, %p177
    %p180 = scmp.ne.s32.totalorder %s165, %s179
    %p181 = scmp.eq.s32.totalorder %s19, 0
    %p182 = por %p180, %p181
    %s183 = ssub.s32 %s13, %s20
    %p184 = scmp.eq.s32.totalorder %s183, 0
    %s186 = sadd.s32 %s185, 1
    %s187 = scalar_select %p184, %s185, %s186
    %p190 = pneg %p184
    %p191 = scmp.eq.s32.totalorder %s13, 1
    %p192 = por %p190, %p191
    %p193 = scmp.ne.s32.totalorder %s185, %s188
    %p194 = scmp.eq.s32.totalorder %s13, 0
    %p195 = por %p193, %p194
    %p196 = scmp.ne.s32.totalorder %s185, %s188
    %p197 = scmp.eq.s32.totalorder %s18, 1
    %p198 = por %p196, %p197
    %p199 = scmp.ne.s32.totalorder %s188, %s189
    %p200 = scmp.eq.s32.totalorder %s18, 0
    %p201 = por %p199, %p200
    %p202 = scmp.ne.s32.totalorder %s188, %s189
    %p203 = scmp.eq.s32.totalorder %s19, 1
    %p204 = por %p202, %p203
    %p206 = scmp.ne.s32.totalorder %s189, %s205
    %p207 = scmp.eq.s32.totalorder %s19, 0
    %p208 = por %p206, %p207
    %p209 = scmp.le.s32.totalorder 1, %s13
    %p210 = scmp.lt.s32.totalorder %s13, 3
    %p211 = pnand %p209, %p210
    %p212 = pneg %p211
    // Predicated region
    $region9: #{_lambda_.8} parent=5 // pred_check
      _
    $region10: #{_lambda_.8} parent=5 // pred_check_branch
      %214 = sbr.rel (%p211) target = $region12
    $region11: #{_lambda_.8} parent=5 // pred_region
      %s215 = ssub.s32 %s13, 1
      // Predicated region
      $region13: #{_lambda_.8} parent=11 // pred_check
        %p216 = pneg %p112
      $region14: #{_lambda_.8} parent=11 // pred_check_branch
        %218 = sbr.rel (%p216) target = $region16
      $region15: #{_lambda_.8} parent=11 // pred_region
        _
      $region16: #{_lambda_.8} parent=11 // pred_fallthru
        _
      // Predicated region
      $region17: #{_lambda_.8} parent=11 // pred_check
        %p219 = pneg %p133
      $region18: #{_lambda_.8} parent=11 // pred_check_branch
        %221 = sbr.rel (%p219) target = $region20
      $region19: #{_lambda_.8} parent=11 // pred_region
        _
      $region20: #{_lambda_.8} parent=11 // pred_fallthru
        _
      // Predicated region
      $region21: #{_lambda_.8} parent=11 // pred_check
        %p222 = pneg %p154
      $region22: #{_lambda_.8} parent=11 // pred_check_branch
        %224 = sbr.rel (%p222) target = $region24
      $region23: #{_lambda_.8} parent=11 // pred_region
        _
      $region24: #{_lambda_.8} parent=11 // pred_fallthru
        _
      // Predicated region
      $region25: #{_lambda_.8} parent=11 // pred_check
        %p225 = pneg %p175
      $region26: #{_lambda_.8} parent=11 // pred_check_branch
        %227 = sbr.rel (%p225) target = $region28
      $region27: #{_lambda_.8} parent=11 // pred_region
        _
      $region28: #{_lambda_.8} parent=11 // pred_fallthru
        _
    $region12: #{_lambda_.8} parent=5 // pred_fallthru
      _
    %p228 = scmp.lt.s32.totalorder %s13, 2
    // Predicated region
    $region29: #{_lambda_.8} parent=5 // pred_check
      %p229 = pneg %p228
    $region30: #{_lambda_.8} parent=5 // pred_check_branch
      %231 = sbr.rel (%p229) target = $region32
    $region31: #{_lambda_.8} parent=5 // pred_region
      // Predicated region
      $region33: #{_lambda_.8} parent=31 // pred_check
        %p232 = pneg %p33
      $region34: #{_lambda_.8} parent=31 // pred_check_branch
        %234 = sbr.rel (%p232) target = $region36
      $region35: #{_lambda_.8} parent=31 // pred_region
        %p235 = scmp.lt.s32.totalorder %s13, 1
        %s236 = scalar_select %p235, %s13, 1
        %s237 = smul.addr %s236, 8
        %s238 = scalar_lea.vmem %s0, %s237
      $region36: #{_lambda_.8} parent=31 // pred_fallthru
        _
      // Predicated region
      $region37: #{_lambda_.8} parent=31 // pred_check
        %p239 = pneg %p59
      $region38: #{_lambda_.8} parent=31 // pred_check_branch
        %241 = sbr.rel (%p239) target = $region40
      $region39: #{_lambda_.8} parent=31 // pred_region
        %p242 = scmp.lt.s32.totalorder %s13, 1
        %s243 = scalar_select %p242, %s13, 1
        %s244 = smul.addr %s243, 8
        %s245 = scalar_lea.vmem %s1, %s244
      $region40: #{_lambda_.8} parent=31 // pred_fallthru
        _
      // Predicated region
      $region41: #{_lambda_.8} parent=31 // pred_check
        %p246 = pneg %p85
      $region42: #{_lambda_.8} parent=31 // pred_check_branch
        %248 = sbr.rel (%p246) target = $region44
      $region43: #{_lambda_.8} parent=31 // pred_region
        %p249 = scmp.lt.s32.totalorder %s13, 1
        %s250 = scalar_select %p249, %s13, 1
        %s251 = smul.addr %s250, 4
        %s252 = scalar_lea.vmem %s2, %s251
      $region44: #{_lambda_.8} parent=31 // pred_fallthru
        _
    $region32: #{_lambda_.8} parent=5 // pred_fallthru
      _
    %p253 = scmp.le.s32.totalorder 1, %s13
    %p254 = scmp.lt.s32.totalorder %s13, 3
    %p255 = pnand %p253, %p254
    %p256 = pneg %p255
    // Predicated region
    $region45: #{_lambda_.8} parent=5 // pred_check
      _
    $region46: #{_lambda_.8} parent=5 // pred_check_branch
      %258 = sbr.rel (%p255) target = $region48
    $region47: #{_lambda_.8} parent=5 // pred_region
      %s259 = ssub.s32 %s13, 1
      %p260 = scmp.lt.s32.totalorder %s18, 1
      %s261 = scalar_select %p260, %s18, 1
      %s262 = smul.addr %s261, 8
      %s263 = scalar_lea.vmem %s0, %s262
      %p264 = pneg %p39
      %p265 = pneg %p36
      %p266 = scmp.lt.s32.totalorder %s18, 1
      %s267 = scalar_select %p266, %s18, 1
      %s268 = smul.addr %s267, 8
      %s269 = scalar_lea.vmem %s1, %s268
      %p270 = pneg %p65
      %p271 = pneg %p62
      %p272 = scmp.lt.s32.totalorder %s18, 1
      %s273 = scalar_select %p272, %s18, 1
      %s274 = smul.addr %s273, 4
      %s275 = scalar_lea.vmem %s2, %s274
      %p276 = pneg %p91
      %p277 = pneg %p88
      %p278 = pneg %p112
      %p279 = pneg %p109
      %p280 = pneg %p133
      %p281 = pneg %p130
      %p282 = pneg %p154
      %p283 = pneg %p151
      %p284 = pneg %p175
      %p285 = pneg %p172
      %p286 = pneg %p201
      %p287 = pneg %p198
      %p288 = scmp.lt.s32.totalorder %s18, 1
      %s289 = scalar_select %p288, %s18, 1
      %s290 = smul.addr %s289, 8
      %s291 = scalar_lea.vmem %s7, %s290
      %p292 = scmp.lt.s32.totalorder %s18, 1
      %s293 = scalar_select %p292, %s18, 1
      %s294 = smul.addr %s293, 8
      %s295 = scalar_lea.vmem %s0, %s294
      %p296 = scmp.lt.s32.totalorder %s18, 1
      %s297 = scalar_select %p296, %s18, 1
      %s298 = smul.addr %s297, 8
      %s299 = scalar_lea.vmem %s1, %s298
      %p300 = scmp.lt.s32.totalorder %s18, 1
      %s301 = scalar_select %p300, %s18, 1
      %s302 = smul.addr %s301, 4
      %s303 = scalar_lea.vmem %s2, %s302
      %p304 = scmp.lt.s32.totalorder %s18, 1
      %s305 = scalar_select %p304, %s18, 1
      %s306 = smul.addr %s305, 8
      %s307 = scalar_lea.vmem %s7, %s306
      %v309 = vld [vmem:[%s299] sm:$0xff]
      %vm310 = vcmask 261120
      %311 = vst.msk [vmem:[#allocation2] sm:$0xff] %vm310, 0.0
      %vm312 = vcmask 254976
      %313 = vst.msk [vmem:[#allocation2 + $0x8] sm:$0x3] %vm312, 0.0
      %v314 = vld [vmem:[%s295] sm:$0xff]
      %316 = vset.pattern.permute.xlu0 0
      %317 = vperm.xlu0 %316, %v309
      %v318 = vpop.permute.xlu0 %317
      %v320 = vmul.f32 %v314, %v318
      %321 = vst.msk [vmem:[#allocation2 + $0x1] sm:$0xff] %vm310, %v320
      %v322 = vld [vmem:[#allocation2] sm:$0xff]
      %v323 = vld [vmem:[#allocation2 + $0x1] sm:$0xff]
      %v324 = vld [vmem:[#allocation2 + $0x2] sm:$0xff]
      %326 = vrot.lane.b32.xlu0 %v323, 32
      %v327 = vpop.permute.xlu0 %326
      %330 = vrot.lane.b32.xlu0 %v324, 64
      %v331 = vpop.permute.xlu0 %330
      %v333 = vsel %vm310, %v322, %v327
      %vm334 = vcmask 523264
      %v335 = vsel %vm334, %v333, %v331
      %v336 = vpack.c.bf16 %v335, %v335
      %v337 = vld [vmem:[%s3] sm:$0xf]
      %v338 = vld [vmem:[%s3 + $0x4] sm:$0xf]
      %v339 = vld [vmem:[%s3 + $0x8] sm:$0xf]
      %v340 = vld [vmem:[%s3 + $0xc] sm:$0xf]
      %v341 = vld [vmem:[%s3 + $0x10] sm:$0xf]
      %v342 = vld [vmem:[%s3 + $0x14] sm:$0xf]
      %v343 = vld [vmem:[%s3 + $0x18] sm:$0xf]
      %v344 = vld [vmem:[%s3 + $0x1c] sm:$0xf]
      %v345 = vld [vmem:[%s3 + $0x20] sm:$0xf]
      %v346 = vld [vmem:[%s3 + $0x24] sm:$0xf]
      %v347 = vld [vmem:[%s3 + $0x28] sm:$0xf]
      %v348 = vld [vmem:[%s3 + $0x2c] sm:$0xf]
      %v349 = vld [vmem:[%s303] sm:$0xf]
      %v350 = vunpack.c.l.bf16 %v349
      %v351 = vld [vmem:[%s4] sm:$0x1]
      %v353 = vperm.slane %v351, 0
      %v367 = vunpack.c.l.b16 %v337
      %v368 = vunpack.c.l.b16 %v338
      %v369 = vunpack.c.l.b16 %v339
      %v370 = vunpack.c.l.b16 %v340
      %v371 = vunpack.c.l.b16 %v341
      %v372 = vunpack.c.l.b16 %v342
      %v373 = vunpack.c.l.b16 %v343
      %v374 = vunpack.c.l.b16 %v344
      %v375 = vunpack.c.l.b16 %v345
      %v376 = vunpack.c.l.b16 %v346
      %v377 = vunpack.c.l.b16 %v347
      %v378 = vunpack.c.l.b16 %v348
      %v379 = vpack.c.b16 %v368, %v367
      %v380 = vpack.c.b16 %v370, %v369
      %v381 = vpack.c.b16 %v372, %v371
      %v382 = vpack.c.b16 %v374, %v373
      %v383 = vpack.c.b16 %v376, %v375
      %v384 = vpack.c.b16 %v378, %v377
      %vm391 = vcmask 785408
      %v393 = vsel %vm391, %v336, 0
      %395 = vmatpush.bf16.msra.mxu0 0
      %396 = vmatpush.bf16.msra.mxu0 0
      %397 = vmatpush.bf16.msra.mxu0 %v384
      %398 = vmatpush.bf16.msra.mxu0 %v383
      %399 = vmatpush.bf16.msra.mxu0 %v382
      %400 = vmatpush.bf16.msra.mxu0 %v381
      %401 = vmatpush.bf16.msra.mxu0 %v380
      %402 = vmatpush.bf16.msra.mxu0 %v379
      %403 = vmatmul.bf16.gmra.mxu0 %v393
      %v404 = vpop.f32.mrf.mxu0
      %v405 = vadd.f32 %v353, %v404
      %v406 = vpop.f32.mrf.mxu0
      %407 = vdwg.mxu0
      %v408 = vadd.f32 %v405, %v350
      %v409 = vtanh.pop %v408
      %v410 = vxor.u32 %v408, 2147483648
      %v411 = vmul.f32 %v410, 1.442695
      %v412 = vpow.pop %v411
      %v413 = vadd.f32 %v412, 1.0
      %v414 = vrcp.pop %v413
      %v415 = vmul.f32 %v413, %v414
      %v416 = vsub.f32 1.0, %v415
      %v417 = vmul.f32 %v414, %v416
      %v418 = vadd.f32 %v414, %v417
      %vm419 = vweird.f32 %v413
      %vm420 = vweird.f32 %v414
      %vm421 = vmor %vm419, %vm420
      %v422 = vsel %vm421, %v414, %v418
      %v423 = vand.u32 2147483647, %v413
      %vm424 = vcmp.eq.f32.partialorder %v423, 8.507059e+37
      %v425 = vand.u32 %v413, 2147483648
      %v426 = vor.u32 1.1754944e-38, %v425
      %v427 = vsel %vm424, %v426, %v422
      %v428 = vmul.f32 1.0, %v427
      %430 = vrot.lane.b32.xlu0 %v428, 96
      %v431 = vpop.permute.xlu0 %430
      %v433 = vmul.f32 %v409, %v431
      %v434 = vpack.c.bf16 %v433, %v433
      %v435 = vld [vmem:[%s5] sm:$0xf]
      %v436 = vld [vmem:[%s5 + $0x4] sm:$0xf]
      %v437 = vld [vmem:[%s5 + $0x8] sm:$0xf]
      %v438 = vld [vmem:[%s5 + $0xc] sm:$0xf]
      %v439 = vld [vmem:[%s6] sm:$0x1]
      %v441 = vperm.slane %v439, 0
      %v447 = vunpack.c.l.b16 %v435
      %v448 = vunpack.c.l.b16 %v436
      %v449 = vunpack.c.l.b16 %v437
      %v450 = vunpack.c.l.b16 %v438
      %v451 = vpack.c.b16 %v448, %v447
      %v452 = vpack.c.b16 %v450, %v449
      %v456 = vsel %vm310, %v434, 0
      %458 = vmatpush.bf16.msra.mxu0 0
      %459 = vmatpush.bf16.msra.mxu0 0
      %460 = vmatpush.bf16.msra.mxu0 0
      %461 = vmatpush.bf16.msra.mxu0 0
      %462 = vmatpush.bf16.msra.mxu0 0
      %463 = vmatpush.bf16.msra.mxu0 0
      %464 = vmatpush.bf16.msra.mxu0 %v452
      %465 = vmatpush.bf16.msra.mxu0 %v451
      %466 = vmatmul.bf16.gmra.mxu0 %v456
      %v467 = vpop.f32.mrf.mxu0
      %v468 = vadd.f32 %v441, %v467
      %v469 = vpop.f32.mrf.mxu0
      %470 = vdwg.mxu0
      %v471 = vadd.f32 %v320, %v468
      %v472 = vmul.f32 %v471, %v318
      %v473 = vadd.f32 %v468, 0.0
      %474 = vst.msk [vmem:[#allocation2 + $0x1] sm:$0xff] %vm310, %v472
      %v475 = vld [vmem:[#allocation2] sm:$0xff]
      %v476 = vld [vmem:[#allocation2 + $0x1] sm:$0xff]
      %v477 = vld [vmem:[#allocation2 + $0x2] sm:$0xff]
      %479 = vrot.lane.b32.xlu0 %v476, 32
      %v480 = vpop.permute.xlu0 %479
      %483 = vrot.lane.b32.xlu0 %v477, 64
      %v484 = vpop.permute.xlu0 %483
      %v486 = vsel %vm310, %v475, %v480
      %v487 = vsel %vm334, %v486, %v484
      %v488 = vpack.c.bf16 %v487, %v487
      %s489 = scalar_lea.vmem %s3, 48
      %v490 = vld [vmem:[%s489] sm:$0xf]
      %v491 = vld [vmem:[%s489 + $0x4] sm:$0xf]
      %v492 = vld [vmem:[%s489 + $0x8] sm:$0xf]
      %v493 = vld [vmem:[%s489 + $0xc] sm:$0xf]
      %v494 = vld [vmem:[%s489 + $0x10] sm:$0xf]
      %v495 = vld [vmem:[%s489 + $0x14] sm:$0xf]
      %v496 = vld [vmem:[%s489 + $0x18] sm:$0xf]
      %v497 = vld [vmem:[%s489 + $0x1c] sm:$0xf]
      %v498 = vld [vmem:[%s489 + $0x20] sm:$0xf]
      %v499 = vld [vmem:[%s489 + $0x24] sm:$0xf]
      %v500 = vld [vmem:[%s489 + $0x28] sm:$0xf]
      %v501 = vld [vmem:[%s489 + $0x2c] sm:$0xf]
      %v502 = vld [vmem:[%s303] sm:$0xf]
      %v503 = vunpack.c.l.bf16 %v502
      %s504 = scalar_lea.vmem %s4, 1
      %v505 = vld [vmem:[%s504] sm:$0x1]
      %v507 = vperm.slane %v505, 0
      %v521 = vunpack.c.l.b16 %v490
      %v522 = vunpack.c.l.b16 %v491
      %v523 = vunpack.c.l.b16 %v492
      %v524 = vunpack.c.l.b16 %v493
      %v525 = vunpack.c.l.b16 %v494
      %v526 = vunpack.c.l.b16 %v495
      %v527 = vunpack.c.l.b16 %v496
      %v528 = vunpack.c.l.b16 %v497
      %v529 = vunpack.c.l.b16 %v498
      %v530 = vunpack.c.l.b16 %v499
      %v531 = vunpack.c.l.b16 %v500
      %v532 = vunpack.c.l.b16 %v501
      %v533 = vpack.c.b16 %v522, %v521
      %v534 = vpack.c.b16 %v524, %v523
      %v535 = vpack.c.b16 %v526, %v525
      %v536 = vpack.c.b16 %v528, %v527
      %v537 = vpack.c.b16 %v530, %v529
      %v538 = vpack.c.b16 %v532, %v531
      %v546 = vsel %vm391, %v488, 0
      %548 = vmatpush.bf16.msra.mxu0 0
      %549 = vmatpush.bf16.msra.mxu0 0
      %550 = vmatpush.bf16.msra.mxu0 %v538
      %551 = vmatpush.bf16.msra.mxu0 %v537
      %552 = vmatpush.bf16.msra.mxu0 %v536
      %553 = vmatpush.bf16.msra.mxu0 %v535
      %554 = vmatpush.bf16.msra.mxu0 %v534
      %555 = vmatpush.bf16.msra.mxu0 %v533
      %556 = vmatmul.bf16.gmra.mxu0 %v546
      %v557 = vpop.f32.mrf.mxu0
      %v558 = vadd.f32 %v507, %v557
      %v559 = vpop.f32.mrf.mxu0
      %560 = vdwg.mxu0
      %562 = vrot.lane.b32.xlu0 %v503, 64
      %v563 = vpop.permute.xlu0 %562
      %v565 = vadd.f32 %v558, %v563
      %v566 = vtanh.pop %v565
      %v567 = vxor.u32 %v565, 2147483648
      %v568 = vmul.f32 %v567, 1.442695
      %v569 = vpow.pop %v568
      %v570 = vadd.f32 %v569, 1.0
      %v571 = vrcp.pop %v570
      %v572 = vmul.f32 %v570, %v571
      %v573 = vsub.f32 1.0, %v572
      %v574 = vmul.f32 %v571, %v573
      %v575 = vadd.f32 %v571, %v574
      %vm576 = vweird.f32 %v570
      %vm577 = vweird.f32 %v571
      %vm578 = vmor %vm576, %vm577
      %v579 = vsel %vm578, %v571, %v575
      %v580 = vand.u32 2147483647, %v570
      %vm581 = vcmp.eq.f32.partialorder %v580, 8.507059e+37
      %v582 = vand.u32 %v570, 2147483648
      %v583 = vor.u32 1.1754944e-38, %v582
      %v584 = vsel %vm581, %v583, %v579
      %v585 = vmul.f32 1.0, %v584
      %587 = vrot.lane.b32.xlu0 %v585, 96
      %v588 = vpop.permute.xlu0 %587
      %v590 = vmul.f32 %v566, %v588
      %v591 = vpack.c.bf16 %v590, %v590
      %s592 = scalar_lea.vmem %s5, 16
      %v593 = vld [vmem:[%s592] sm:$0xf]
      %v594 = vld [vmem:[%s592 + $0x4] sm:$0xf]
      %v595 = vld [vmem:[%s592 + $0x8] sm:$0xf]
      %v596 = vld [vmem:[%s592 + $0xc] sm:$0xf]
      %s597 = scalar_lea.vmem %s6, 1
      %v598 = vld [vmem:[%s597] sm:$0x1]
      %v600 = vperm.slane %v598, 0
      %v606 = vunpack.c.l.b16 %v593
      %v607 = vunpack.c.l.b16 %v594
      %v608 = vunpack.c.l.b16 %v595
      %v609 = vunpack.c.l.b16 %v596
      %v610 = vpack.c.b16 %v607, %v606
      %v611 = vpack.c.b16 %v609, %v608
      %v615 = vsel %vm310, %v591, 0
      %617 = vmatpush.bf16.msra.mxu0 0
      %618 = vmatpush.bf16.msra.mxu0 0
      %619 = vmatpush.bf16.msra.mxu0 0
      %620 = vmatpush.bf16.msra.mxu0 0
      %621 = vmatpush.bf16.msra.mxu0 0
      %622 = vmatpush.bf16.msra.mxu0 0
      %623 = vmatpush.bf16.msra.mxu0 %v611
      %624 = vmatpush.bf16.msra.mxu0 %v610
      %625 = vmatmul.bf16.gmra.mxu0 %v615
      %v626 = vpop.f32.mrf.mxu0
      %v627 = vadd.f32 %v600, %v626
      %v628 = vpop.f32.mrf.mxu0
      %629 = vdwg.mxu0
      %v630 = vadd.f32 %v473, %v627
      %v631 = vmul.f32 %v630, %v318
      %633 = vrot.lane.b32.xlu0 %v631, 96
      %v634 = vpop.permute.xlu0 %633
      %636 = vst.msk [vmem:[%s307] sm:$0xff] %vm310, %v634
      %p637 = scmp.lt.s32.totalorder %s18, 1
      %s638 = scalar_select %p637, %s18, 1
      %s639 = smul.addr %s638, 8
      %s640 = scalar_lea.vmem %s7, %s639
      // Predicated region
      $region49: #{_lambda_.8} parent=47 // pred_check
        %p641 = pneg %p198
      $region50: #{_lambda_.8} parent=47 // pred_check_branch
        %643 = sbr.rel (%p641) target = $region52
      $region51: #{_lambda_.8} parent=47 // pred_region
        _
      $region52: #{_lambda_.8} parent=47 // pred_fallthru
        _
    $region48: #{_lambda_.8} parent=5 // pred_fallthru
      _
    %p644 = scmp.le.s32.totalorder 2, %s13
    // Predicated region
    $region53: #{_lambda_.8} parent=5 // pred_check
      %p645 = pneg %p644
    $region54: #{_lambda_.8} parent=5 // pred_check_branch
      %647 = sbr.rel (%p645) target = $region56
    $region55: #{_lambda_.8} parent=5 // pred_region
      %s648 = ssub.s32 %s13, 2
      // Predicated region
      $region57: #{_lambda_.8} parent=55 // pred_check
        %p649 = pneg %p204
      $region58: #{_lambda_.8} parent=55 // pred_check_branch
        %651 = sbr.rel (%p649) target = $region60
      $region59: #{_lambda_.8} parent=55 // pred_region
        %p652 = scmp.lt.s32.totalorder %s19, 1
        %s653 = scalar_select %p652, %s19, 1
        %s654 = smul.addr %s653, 8
        %s655 = scalar_lea.vmem %s7, %s654
      $region60: #{_lambda_.8} parent=55 // pred_fallthru
        _
    $region56: #{_lambda_.8} parent=5 // pred_fallthru
      _
  $region6: #{_lambda_.8} parent=0 // loop_footer
    %s17 = sadd.s32 1, %s13
  $region7: #{_lambda_.8} parent=0 // loop_footer_branch
    %12 = sbr.rel target = $region3
  $region8: #{_lambda_.8} parent=0 // loop_exit
    _

</llo_original>
